<compile_context>
chip_gen: v7x
topology: tpu7x:2x2x1
jax: 0.10.0
libtpu: 0.0.40
codegen_flags: <defaults>
</compile_context>

<pallas_src>
import functools

import jax
import jax.numpy as jnp
from jax.experimental import pallas as pl
from jax.experimental.pallas import tpu as pltpu

# ---- "global" hyper-parameters implied by the module -----------------------
IMG_HEIGHT = 16
IMG_WIDTH = 16
NUM_CHANNELS = 4
NUM_CLASSES = 10
HIDDEN_DIM = 512                                      # matches hiddenDim = 512
INPUT_DIM = IMG_HEIGHT * IMG_WIDTH * NUM_CHANNELS     # 1024
PADDED_CLASSES = 128                                  # lane-dense classifier width
NEG_BIG = -1e30                                       # python float: baked into b2_p


def _round_up(x, m):
    return ((x + m - 1) // m) * m


def _net_kernel(x_ref, w1_ref, b1_ref, w2_ref, b2_ref, o_ref):
    # fc1 + ReLU : cast x to bf16 right before the MXU, f32 accumulation.
    x_bf = x_ref[...].astype(jnp.bfloat16)
    h = jnp.dot(x_bf, w1_ref[...], preferred_element_type=jnp.float32)
    h = jnp.maximum(h + b1_ref[...], 0.0)             # activationFunction = relu
    # fc2 (lane-padded to 128 output columns).  Padded W2 columns are zero and
    # the padded bias lanes are -1e30, so padded logits are exactly -1e30 and
    # vanish from the max / logsumexp below — no in-kernel mask needed.
    logits = jnp.dot(h.astype(jnp.bfloat16), w2_ref[...],
                     preferred_element_type=jnp.float32) + b2_ref[...]
    # Numerically-stable log_softmax along the last axis (all in f32).
    m = jnp.max(logits, axis=-1, keepdims=True)
    s = logits - m
    lse = jnp.log(jnp.sum(jnp.exp(s), axis=-1, keepdims=True))
    o_ref[...] = (s - lse).astype(o_ref.dtype)


def prepare_params(w1, b1, w2, b2):
    """One-time weight prep: bf16 cast + lane-dense padding of the classifier.
    Call once at parameter-load time; pass the result to net_forward."""
    w1_bf = w1.astype(jnp.bfloat16)                               # (1024, 512)
    b1_2d = b1.reshape(1, HIDDEN_DIM).astype(jnp.float32)         # (1, 512)
    w2_p = jnp.zeros((HIDDEN_DIM, PADDED_CLASSES), jnp.bfloat16)
    w2_p = w2_p.at[:, :NUM_CLASSES].set(w2.astype(jnp.bfloat16))  # (512, 128)
    # Padded class lanes get a huge negative bias -> they never affect softmax.
    b2_p = jnp.full((1, PADDED_CLASSES), NEG_BIG, jnp.float32)
    b2_p = b2_p.at[:, :NUM_CLASSES].set(b2.astype(jnp.float32))   # (1, 128)
    return w1_bf, b1_2d, w2_p, b2_p


@functools.partial(jax.jit, static_argnames=("tile_b",))
def net_forward(x_nchw, w1_bf, b1_2d, w2_p, b2_p, *, tile_b=1024):
    """x_nchw: (B, C, H, W) float32 -> (B, NUM_CLASSES) f32 log-probabilities.
    Weights must come from prepare_params()."""
    B = x_nchw.shape[0]
    x2d = x_nchw.reshape(B, INPUT_DIM)        # torch flatten order; reshape is free

    # Batch tile: multiple of 16, and (for batches >= 32 rows) capped so the
    # grid has >= 2 steps -> the "parallel" axis shards across both v7x TCs.
    tb = min(tile_b, _round_up(B, 16))
    if B >= 32:
        tb = min(tb, _round_up(-(-B // 2), 16))
    Bp = _round_up(B, tb)
    if Bp != B:
        x2d = jnp.pad(x2d, ((0, Bp - B), (0, 0)))
    n_tiles = Bp // tb

    flops = 2 * Bp * (INPUT_DIM * HIDDEN_DIM + HIDDEN_DIM * PADDED_CLASSES)
    bytes_accessed = (Bp * INPUT_DIM * 4                 # x tiles (f32 in)
                      + w1_bf.size * 2 + w2_p.size * 2   # resident bf16 weights
                      + b1_2d.size * 4 + b2_p.size * 4   # resident f32 biases
                      + Bp * PADDED_CLASSES * 4)         # f32 log-prob tiles out

    out_padded = pl.pallas_call(
        _net_kernel,
        out_shape=jax.ShapeDtypeStruct((Bp, PADDED_CLASSES), jnp.float32),
        grid=(n_tiles,),
        in_specs=[
            pl.BlockSpec((tb, INPUT_DIM), lambda i: (i, 0)),              # x tile
            pl.BlockSpec((INPUT_DIM, HIDDEN_DIM), lambda i: (0, 0)),      # W1 resident
            pl.BlockSpec((1, HIDDEN_DIM), lambda i: (0, 0)),              # b1 resident
            pl.BlockSpec((HIDDEN_DIM, PADDED_CLASSES), lambda i: (0, 0)), # W2 resident
            pl.BlockSpec((1, PADDED_CLASSES), lambda i: (0, 0)),          # b2 resident
        ],
        out_specs=pl.BlockSpec((tb, PADDED_CLASSES), lambda i: (i, 0)),
        compiler_params=pltpu.CompilerParams(
            dimension_semantics=("parallel",)),
        cost_estimate=pl.CostEstimate(
            flops=flops,
            transcendentals=Bp * (PADDED_CLASSES + 1),
            bytes_accessed=bytes_accessed),
    )(x2d, w1_bf, b1_2d, w2_p, b2_p)

    # Slice off padded class lanes / padded batch rows.
    return out_padded[:B, :NUM_CLASSES]


def net_reference(x_nchw, w1, b1, w2, b2):
    """Pure-JAX reference with the same bf16-MXU / f32-accumulation policy."""
    B = x_nchw.shape[0]
    x2d = x_nchw.reshape(B, INPUT_DIM).astype(jnp.bfloat16)
    h = jnp.dot(x2d, w1.astype(jnp.bfloat16),
                preferred_element_type=jnp.float32) + b1.astype(jnp.float32)
    h = jnp.maximum(h, 0.0)
    logits = jnp.dot(h.astype(jnp.bfloat16), w2.astype(jnp.bfloat16),
                     preferred_element_type=jnp.float32) + b2.astype(jnp.float32)
    return jax.nn.log_softmax(logits, axis=-1)


def init_params(key):
    """Mirror torch.nn.Linear default init (U[-1/sqrt(fan_in), 1/sqrt(fan_in)]).
    Weights stored as (in_features, out_features)."""
    k1, k2, k3, k4 = jax.random.split(key, 4)
    lim1 = 1.0 / float(INPUT_DIM) ** 0.5
    lim2 = 1.0 / float(HIDDEN_DIM) ** 0.5
    w1 = jax.random.uniform(k1, (INPUT_DIM, HIDDEN_DIM), jnp.float32, -lim1, lim1)
    b1 = jax.random.uniform(k2, (HIDDEN_DIM,), jnp.float32, -lim1, lim1)
    w2 = jax.random.uniform(k3, (HIDDEN_DIM, NUM_CLASSES), jnp.float32, -lim2, lim2)
    b2 = jax.random.uniform(k4, (NUM_CLASSES,), jnp.float32, -lim2, lim2)
    return w1, b1, w2, b2


if __name__ == "__main__":
    key = jax.random.PRNGKey(0)
    kx, kp = jax.random.split(key)
    x = jax.random.normal(kx, (2, NUM_CHANNELS, IMG_HEIGHT, IMG_WIDTH), jnp.float32)
    w1, b1, w2, b2 = init_params(kp)

    prepped = prepare_params(w1, b1, w2, b2)   # one-time weight prep (hoisted)
    out = net_forward(x, *prepped)
    out = jax.block_until_ready(out)

    # sanity: shape, normalization, and agreement with the pure-JAX reference
    assert out.shape == (2, NUM_CLASSES)
    row_sums = jnp.exp(out).sum(axis=-1)
    assert jnp.allclose(row_sums, 1.0, atol=1e-4), row_sums
    ref = net_reference(x, w1, b1, w2, b2)
    assert jnp.allclose(out, ref, atol=2e-2, rtol=2e-2), jnp.max(jnp.abs(out - ref))

    print("KERNEL_OK")
</pallas_src>

<mosaic_0001>
module attributes {stable_mosaic.version = 11 : i64} {
  func.func @_net_kernel(%arg0: i32, %arg1: memref<16x1024xf32, #tpu.memory_space<vmem>>, %arg2: memref<1024x512xbf16, #tpu.memory_space<vmem>>, %arg3: memref<1x512xf32, #tpu.memory_space<vmem>>, %arg4: memref<512x128xbf16, #tpu.memory_space<vmem>>, %arg5: memref<1x128xf32, #tpu.memory_space<vmem>>, %arg6: memref<16x128xf32, #tpu.memory_space<vmem>>) attributes {dimension_semantics = [#tpu.dimension_semantics<parallel>], iteration_bounds = array<i64: 1>, scalar_prefetch = 0 : i64, scratch_operands = 0 : i64, tpu.core_type = #tpu.core_type<tc>, window_params = [{transform_indices = @transform_0, window_bounds = array<i64: 16, 1024>}, {pipeline_mode = #tpu.pipeline_mode<synchronous>, transform_indices = @transform_1, window_bounds = array<i64: 1024, 512>}, {pipeline_mode = #tpu.pipeline_mode<synchronous>, transform_indices = @transform_2, window_bounds = array<i64: 1, 512>}, {pipeline_mode = #tpu.pipeline_mode<synchronous>, transform_indices = @transform_3, window_bounds = array<i64: 512, 128>}, {pipeline_mode = #tpu.pipeline_mode<synchronous>, transform_indices = @transform_4, window_bounds = array<i64: 1, 128>}, {transform_indices = @transform_5, window_bounds = array<i64: 16, 128>}]} {
    %c0 = arith.constant 0 : index
    %c0_0 = arith.constant 0 : index
    %0 = vector.load %arg1[%c0, %c0_0] : memref<16x1024xf32, #tpu.memory_space<vmem>>, vector<16x1024xf32>
    %1 = arith.truncf %0 : vector<16x1024xf32> to vector<16x1024xbf16>
    %c0_1 = arith.constant 0 : index
    %c0_2 = arith.constant 0 : index
    %2 = vector.load %arg2[%c0_1, %c0_2] : memref<1024x512xbf16, #tpu.memory_space<vmem>>, vector<1024x512xbf16>
    %cst = arith.constant dense<0.000000e+00> : vector<16x512xf32>
    %3 = tpu.matmul %1, %2, %cst {dimension_numbers = #tpu.dot_dimension_numbers<[1], [0], [0], [1], [0, 0, 1, 1], [], []>} : vector<16x1024xbf16>, vector<1024x512xbf16>, vector<16x512xf32> -> vector<16x512xf32>
    %c0_3 = arith.constant 0 : index
    %c0_4 = arith.constant 0 : index
    %4 = vector.load %arg3[%c0_3, %c0_4] : memref<1x512xf32, #tpu.memory_space<vmem>>, vector<1x512xf32>
    %5 = vector.broadcast %4 : vector<1x512xf32> to vector<16x512xf32>
    %6 = arith.addf %3, %5 : vector<16x512xf32>
    %cst_5 = arith.constant 0.000000e+00 : f32
    %7 = vector.broadcast %cst_5 : f32 to vector<16x512xf32>
    %8 = arith.maximumf %6, %7 : vector<16x512xf32>
    %9 = arith.truncf %8 : vector<16x512xf32> to vector<16x512xbf16>
    %c0_6 = arith.constant 0 : index
    %c0_7 = arith.constant 0 : index
    %10 = vector.load %arg4[%c0_6, %c0_7] : memref<512x128xbf16, #tpu.memory_space<vmem>>, vector<512x128xbf16>
    %cst_8 = arith.constant dense<0.000000e+00> : vector<16x128xf32>
    %11 = tpu.matmul %9, %10, %cst_8 {dimension_numbers = #tpu.dot_dimension_numbers<[1], [0], [0], [1], [0, 0, 1, 1], [], []>} : vector<16x512xbf16>, vector<512x128xbf16>, vector<16x128xf32> -> vector<16x128xf32>
    %c0_9 = arith.constant 0 : index
    %c0_10 = arith.constant 0 : index
    %12 = vector.load %arg5[%c0_9, %c0_10] : memref<1x128xf32, #tpu.memory_space<vmem>>, vector<1x128xf32>
    %13 = vector.broadcast %12 : vector<1x128xf32> to vector<16x128xf32>
    %14 = arith.addf %11, %13 : vector<16x128xf32>
    %cst_11 = arith.constant dense<0xFF800000> : vector<16xf32>
    %15 = vector.multi_reduction <maximumf>, %14, %cst_11 [1] : vector<16x128xf32> to vector<16xf32>
    %16 = vector.shape_cast %15 : vector<16xf32> to vector<16x1xf32>
    %17 = vector.broadcast %16 : vector<16x1xf32> to vector<16x128xf32>
    %18 = arith.subf %14, %17 : vector<16x128xf32>
    %19 = math.exp %18 : vector<16x128xf32>
    %cst_12 = arith.constant dense<0.000000e+00> : vector<16xf32>
    %20 = vector.multi_reduction <add>, %19, %cst_12 [1] : vector<16x128xf32> to vector<16xf32>
    %21 = vector.shape_cast %20 : vector<16xf32> to vector<16x1xf32>
    %22 = math.log %21 : vector<16x1xf32>
    %23 = vector.broadcast %22 : vector<16x1xf32> to vector<16x128xf32>
    %24 = arith.subf %18, %23 : vector<16x128xf32>
    %c0_13 = arith.constant 0 : index
    %c0_14 = arith.constant 0 : index
    %25 = vector.load %arg6[%c0_13, %c0_14] : memref<16x128xf32, #tpu.memory_space<vmem>>, vector<16x128xf32>
    tpu.vector_store %arg6[%c0_13, %c0_14], %24 {strides = array<i32>} : memref<16x128xf32, #tpu.memory_space<vmem>>, vector<16x128xf32>,
    return
  }
  func.func @transform_0(%arg0: i32) -> (i32, i32) {
    %c0_i32 = arith.constant 0 : i32
    %c0_i32_0 = arith.constant 0 : i32
    return %arg0, %c0_i32 : i32, i32
  }
  func.func @transform_1(%arg0: i32) -> (i32, i32) {
    %c0_i32 = arith.constant 0 : i32
    %c0_i32_0 = arith.constant 0 : i32
    %c0_i32_1 = arith.constant 0 : i32
    return %c0_i32, %c0_i32_0 : i32, i32
  }
  func.func @transform_2(%arg0: i32) -> (i32, i32) {
    %c0_i32 = arith.constant 0 : i32
    %c0_i32_0 = arith.constant 0 : i32
    %c0_i32_1 = arith.constant 0 : i32
    return %c0_i32, %c0_i32_0 : i32, i32
  }
  func.func @transform_3(%arg0: i32) -> (i32, i32) {
    %c0_i32 = arith.constant 0 : i32
    %c0_i32_0 = arith.constant 0 : i32
    %c0_i32_1 = arith.constant 0 : i32
    return %c0_i32, %c0_i32_0 : i32, i32
  }
  func.func @transform_4(%arg0: i32) -> (i32, i32) {
    %c0_i32 = arith.constant 0 : i32
    %c0_i32_0 = arith.constant 0 : i32
    %c0_i32_1 = arith.constant 0 : i32
    return %c0_i32, %c0_i32_0 : i32, i32
  }
  func.func @transform_5(%arg0: i32) -> (i32, i32) {
    %c0_i32 = arith.constant 0 : i32
    %c0_i32_0 = arith.constant 0 : i32
    return %arg0, %c0_i32 : i32, i32
  }
}

</mosaic_0001>

<llo_original>
// kernel: net_forward.1
$region0: #{net_forward.1}
  #allocation0 [shape = 'u32[]', space=smem, size = 0x4, offset = 0x4, fixed_abs, tag = 'smem constant byte address 0x4 - core index']
  #allocation1 [shape = 'u32[144,128]{1,0:T(1,128)}', space=vmem, size = 0x12000, scoped, tag = 'internal scratch']
  %s0 = inlined_call_operand.vmem [shape: f32[16,1024], index: 0, kind: input, shape index: {}]
  %s1 = inlined_call_operand.hbm [shape: bf16[1024,512], index: 1, kind: input, shape index: {}]
  %s2 = inlined_call_operand.vmem [shape: f32[1,512], index: 2, kind: input, shape index: {}]
  %s3 = inlined_call_operand.vmem [shape: bf16[512,128], index: 3, kind: input, shape index: {}]
  %s4 = inlined_call_operand.vmem [shape: f32[1,128], index: 4, kind: input, shape index: {}]
  %s5 = inlined_call_operand.vmem [shape: f32[16,128], index: 5, kind: output, shape index: {}]
  %s6 = sld [smem:[#allocation0]]
  $region34: #{net_forward.1} parent=0
    _
  %s8 = ssub.s32 1, %s6
  %s9 = scalar_select 0, %s8, %s6
  $region1: #{net_forward.1} parent=0
    #allocation2 [shape = 'u8[1048576]{0}', space=vmem, size = 0x100000, scoped, tag = 'input window, operand 1, single buffered']
    #allocation3 [shape = 's32[1]{0}', space=sflag, size = 0x4, scoped, tag = 'scoped memory for net_forward.1']
    %10 = vsyncpa [#allocation3], 0
    // Predicated region
    $region2: #{net_forward.1} parent=1 // pred_check
      _
    $region3: #{net_forward.1} parent=1 // pred_check_branch
      %12 = sbr.rel (0) target = $region5
    $region4: #{net_forward.1} parent=1 // pred_region
      _
    $region5: #{net_forward.1} parent=1 // pred_fallthru
      _
    // Predicated region
    $region6: #{net_forward.1} parent=1 // pred_check
      _
    $region7: #{net_forward.1} parent=1 // pred_check_branch
      %14 = sbr.rel (0) target = $region9
    $region8: #{net_forward.1} parent=1 // pred_region
      %s16 = ssub.s32 32768, 32768
      %17 = vsyncadd [#allocation3], %s16
      %s18 = sshll.u32 [#allocation2], 4
      %s19 = int_to_ptr.vmem [resolvable:$true] %s18
      %24 = dma.hbm_to_vmem [thread:$0]  %s1, 32768, %s19, [#allocation3], 256, 256, 16
    $region9: #{net_forward.1} parent=1 // pred_fallthru
      _
    // Predicated region
    $region10: #{net_forward.1} parent=1 // pred_check
      _
    $region11: #{net_forward.1} parent=1 // pred_check_branch
      %26 = sbr.rel (0) target = $region13
    $region12: #{net_forward.1} parent=1 // pred_region
      _
    $region13: #{net_forward.1} parent=1 // pred_fallthru
      _
    // Predicated region
    $region14: #{net_forward.1} parent=1 // pred_check
      _
    $region15: #{net_forward.1} parent=1 // pred_check_branch
      %28 = sbr.rel (0) target = $region17
    $region16: #{net_forward.1} parent=1 // pred_region
      _
    $region17: #{net_forward.1} parent=1 // pred_fallthru
      _
    // Predicated region
    $region18: #{net_forward.1} parent=1 // pred_check
      _
    $region19: #{net_forward.1} parent=1 // pred_check_branch
      %30 = sbr.rel (0) target = $region21
    $region20: #{net_forward.1} parent=1 // pred_region
      _
    $region21: #{net_forward.1} parent=1 // pred_fallthru
      _
    // Predicated region
    $region22: #{net_forward.1} parent=1 // pred_check
      _
    $region23: #{net_forward.1} parent=1 // pred_check_branch
      %32 = sbr.rel (0) target = $region25
    $region24: #{net_forward.1} parent=1 // pred_region
      %33 = dma.done [#allocation3], 32768
    $region25: #{net_forward.1} parent=1 // pred_fallthru
      _
    %v35 = vld [vmem:[%s0] sm:$0xff]
    %v36 = vld [vmem:[%s0 + $0x8] sm:$0xff]
    %v37 = vld [vmem:[%s0 + $0x10] sm:$0xff]
    %v38 = vld [vmem:[%s0 + $0x18] sm:$0xff]
    %v39 = vld [vmem:[%s0 + $0x20] sm:$0xff]
    %v40 = vld [vmem:[%s0 + $0x28] sm:$0xff]
    %v41 = vld [vmem:[%s0 + $0x30] sm:$0xff]
    %v42 = vld [vmem:[%s0 + $0x38] sm:$0xff]
    %v43 = vld [vmem:[%s0 + $0x40] sm:$0xff]
    %v44 = vld [vmem:[%s0 + $0x48] sm:$0xff]
    %v45 = vld [vmem:[%s0 + $0x50] sm:$0xff]
    %v46 = vld [vmem:[%s0 + $0x58] sm:$0xff]
    %v47 = vld [vmem:[%s0 + $0x60] sm:$0xff]
    %v48 = vld [vmem:[%s0 + $0x68] sm:$0xff]
    %v49 = vld [vmem:[%s0 + $0x70] sm:$0xff]
    %v50 = vld [vmem:[%s0 + $0x78] sm:$0xff]
    %v51 = vpack.c.bf16 %v43, %v35
    %v52 = vpack.c.bf16 %v44, %v36
    %v53 = vpack.c.bf16 %v45, %v37
    %v54 = vpack.c.bf16 %v46, %v38
    %v55 = vpack.c.bf16 %v47, %v39
    %v56 = vpack.c.bf16 %v48, %v40
    %v57 = vpack.c.bf16 %v49, %v41
    %v58 = vpack.c.bf16 %v50, %v42
    %v59 = vld [vmem:[#allocation2] sm:$0xff]
    %v60 = vld [vmem:[#allocation2 + $0x8] sm:$0xff]
    %v61 = vld [vmem:[#allocation2 + $0x10] sm:$0xff]
    %v62 = vld [vmem:[#allocation2 + $0x18] sm:$0xff]
    %v63 = vld [vmem:[#allocation2 + $0x20] sm:$0xff]
    %v64 = vld [vmem:[#allocation2 + $0x28] sm:$0xff]
    %v65 = vld [vmem:[#allocation2 + $0x30] sm:$0xff]
    %v66 = vld [vmem:[#allocation2 + $0x38] sm:$0xff]
    %v67 = vld [vmem:[#allocation2 + $0x40] sm:$0xff]
    %v68 = vld [vmem:[#allocation2 + $0x48] sm:$0xff]
    %v69 = vld [vmem:[#allocation2 + $0x50] sm:$0xff]
    %v70 = vld [vmem:[#allocation2 + $0x58] sm:$0xff]
    %v71 = vld [vmem:[#allocation2 + $0x60] sm:$0xff]
    %v72 = vld [vmem:[#allocation2 + $0x68] sm:$0xff]
    %v73 = vld [vmem:[#allocation2 + $0x70] sm:$0xff]
    %v74 = vld [vmem:[#allocation2 + $0x78] sm:$0xff]
    %v75 = vld [vmem:[#allocation2 + $0x80] sm:$0xff]
    %v76 = vld [vmem:[#allocation2 + $0x88] sm:$0xff]
    %v77 = vld [vmem:[#allocation2 + $0x90] sm:$0xff]
    %v78 = vld [vmem:[#allocation2 + $0x98] sm:$0xff]
    %v79 = vld [vmem:[#allocation2 + $0xa0] sm:$0xff]
    %v80 = vld [vmem:[#allocation2 + $0xa8] sm:$0xff]
    %v81 = vld [vmem:[#allocation2 + $0xb0] sm:$0xff]
    %v82 = vld [vmem:[#allocation2 + $0xb8] sm:$0xff]
    %v83 = vld [vmem:[#allocation2 + $0xc0] sm:$0xff]
    %v84 = vld [vmem:[#allocation2 + $0xc8] sm:$0xff]
    %v85 = vld [vmem:[#allocation2 + $0xd0] sm:$0xff]
    %v86 = vld [vmem:[#allocation2 + $0xd8] sm:$0xff]
    %v87 = vld [vmem:[#allocation2 + $0xe0] sm:$0xff]
    %v88 = vld [vmem:[#allocation2 + $0xe8] sm:$0xff]
    %v89 = vld [vmem:[#allocation2 + $0xf0] sm:$0xff]
    %v90 = vld [vmem:[#allocation2 + $0xf8] sm:$0xff]
    %v91 = vld [vmem:[#allocation2 + $0x100] sm:$0xff]
    %v92 = vld [vmem:[#allocation2 + $0x108] sm:$0xff]
    %v93 = vld [vmem:[#allocation2 + $0x110] sm:$0xff]
    %v94 = vld [vmem:[#allocation2 + $0x118] sm:$0xff]
    %v95 = vld [vmem:[#allocation2 + $0x120] sm:$0xff]
    %v96 = vld [vmem:[#allocation2 + $0x128] sm:$0xff]
    %v97 = vld [vmem:[#allocation2 + $0x130] sm:$0xff]
    %v98 = vld [vmem:[#allocation2 + $0x138] sm:$0xff]
    %v99 = vld [vmem:[#allocation2 + $0x140] sm:$0xff]
    %v100 = vld [vmem:[#allocation2 + $0x148] sm:$0xff]
    %v101 = vld [vmem:[#allocation2 + $0x150] sm:$0xff]
    %v102 = vld [vmem:[#allocation2 + $0x158] sm:$0xff]
    %v103 = vld [vmem:[#allocation2 + $0x160] sm:$0xff]
    %v104 = vld [vmem:[#allocation2 + $0x168] sm:$0xff]
    %v105 = vld [vmem:[#allocation2 + $0x170] sm:$0xff]
    %v106 = vld [vmem:[#allocation2 + $0x178] sm:$0xff]
    %v107 = vld [vmem:[#allocation2 + $0x180] sm:$0xff]
    %v108 = vld [vmem:[#allocation2 + $0x188] sm:$0xff]
    %v109 = vld [vmem:[#allocation2 + $0x190] sm:$0xff]
    %v110 = vld [vmem:[#allocation2 + $0x198] sm:$0xff]
    %v111 = vld [vmem:[#allocation2 + $0x1a0] sm:$0xff]
    %v112 = vld [vmem:[#allocation2 + $0x1a8] sm:$0xff]
    %v113 = vld [vmem:[#allocation2 + $0x1b0] sm:$0xff]
    %v114 = vld [vmem:[#allocation2 + $0x1b8] sm:$0xff]
    %v115 = vld [vmem:[#allocation2 + $0x1c0] sm:$0xff]
    %v116 = vld [vmem:[#allocation2 + $0x1c8] sm:$0xff]
    %v117 = vld [vmem:[#allocation2 + $0x1d0] sm:$0xff]
    %v118 = vld [vmem:[#allocation2 + $0x1d8] sm:$0xff]
    %v119 = vld [vmem:[#allocation2 + $0x1e0] sm:$0xff]
    %v120 = vld [vmem:[#allocation2 + $0x1e8] sm:$0xff]
    %v121 = vld [vmem:[#allocation2 + $0x1f0] sm:$0xff]
    %v122 = vld [vmem:[#allocation2 + $0x1f8] sm:$0xff]
    %v123 = vld [vmem:[#allocation2 + $0x200] sm:$0xff]
    %v124 = vld [vmem:[#allocation2 + $0x208] sm:$0xff]
    %v125 = vld [vmem:[#allocation2 + $0x210] sm:$0xff]
    %v126 = vld [vmem:[#allocation2 + $0x218] sm:$0xff]
    %v127 = vld [vmem:[#allocation2 + $0x220] sm:$0xff]
    %v128 = vld [vmem:[#allocation2 + $0x228] sm:$0xff]
    %v129 = vld [vmem:[#allocation2 + $0x230] sm:$0xff]
    %v130 = vld [vmem:[#allocation2 + $0x238] sm:$0xff]
    %v131 = vld [vmem:[#allocation2 + $0x240] sm:$0xff]
    %v132 = vld [vmem:[#allocation2 + $0x248] sm:$0xff]
    %v133 = vld [vmem:[#allocation2 + $0x250] sm:$0xff]
    %v134 = vld [vmem:[#allocation2 + $0x258] sm:$0xff]
    %v135 = vld [vmem:[#allocation2 + $0x260] sm:$0xff]
    %v136 = vld [vmem:[#allocation2 + $0x268] sm:$0xff]
    %v137 = vld [vmem:[#allocation2 + $0x270] sm:$0xff]
    %v138 = vld [vmem:[#allocation2 + $0x278] sm:$0xff]
    %v139 = vld [vmem:[#allocation2 + $0x280] sm:$0xff]
    %v140 = vld [vmem:[#allocation2 + $0x288] sm:$0xff]
    %v141 = vld [vmem:[#allocation2 + $0x290] sm:$0xff]
    %v142 = vld [vmem:[#allocation2 + $0x298] sm:$0xff]
    %v143 = vld [vmem:[#allocation2 + $0x2a0] sm:$0xff]
    %v144 = vld [vmem:[#allocation2 + $0x2a8] sm:$0xff]
    %v145 = vld [vmem:[#allocation2 + $0x2b0] sm:$0xff]
    %v146 = vld [vmem:[#allocation2 + $0x2b8] sm:$0xff]
    %v147 = vld [vmem:[#allocation2 + $0x2c0] sm:$0xff]
    %v148 = vld [vmem:[#allocation2 + $0x2c8] sm:$0xff]
    %v149 = vld [vmem:[#allocation2 + $0x2d0] sm:$0xff]
    %v150 = vld [vmem:[#allocation2 + $0x2d8] sm:$0xff]
    %v151 = vld [vmem:[#allocation2 + $0x2e0] sm:$0xff]
    %v152 = vld [vmem:[#allocation2 + $0x2e8] sm:$0xff]
    %v153 = vld [vmem:[#allocation2 + $0x2f0] sm:$0xff]
    %v154 = vld [vmem:[#allocation2 + $0x2f8] sm:$0xff]
    %v155 = vld [vmem:[#allocation2 + $0x300] sm:$0xff]
    %v156 = vld [vmem:[#allocation2 + $0x308] sm:$0xff]
    %v157 = vld [vmem:[#allocation2 + $0x310] sm:$0xff]
    %v158 = vld [vmem:[#allocation2 + $0x318] sm:$0xff]
    %v159 = vld [vmem:[#allocation2 + $0x320] sm:$0xff]
    %v160 = vld [vmem:[#allocation2 + $0x328] sm:$0xff]
    %v161 = vld [vmem:[#allocation2 + $0x330] sm:$0xff]
    %v162 = vld [vmem:[#allocation2 + $0x338] sm:$0xff]
    %v163 = vld [vmem:[#allocation2 + $0x340] sm:$0xff]
    %v164 = vld [vmem:[#allocation2 + $0x348] sm:$0xff]
    %v165 = vld [vmem:[#allocation2 + $0x350] sm:$0xff]
    %v166 = vld [vmem:[#allocation2 + $0x358] sm:$0xff]
    %v167 = vld [vmem:[#allocation2 + $0x360] sm:$0xff]
    %v168 = vld [vmem:[#allocation2 + $0x368] sm:$0xff]
    %v169 = vld [vmem:[#allocation2 + $0x370] sm:$0xff]
    %v170 = vld [vmem:[#allocation2 + $0x378] sm:$0xff]
    %v171 = vld [vmem:[#allocation2 + $0x380] sm:$0xff]
    %v172 = vld [vmem:[#allocation2 + $0x388] sm:$0xff]
    %v173 = vld [vmem:[#allocation2 + $0x390] sm:$0xff]
    %v174 = vld [vmem:[#allocation2 + $0x398] sm:$0xff]
    %v175 = vld [vmem:[#allocation2 + $0x3a0] sm:$0xff]
    %v176 = vld [vmem:[#allocation2 + $0x3a8] sm:$0xff]
    %v177 = vld [vmem:[#allocation2 + $0x3b0] sm:$0xff]
    %v178 = vld [vmem:[#allocation2 + $0x3b8] sm:$0xff]
    %v179 = vld [vmem:[#allocation2 + $0x3c0] sm:$0xff]
    %v180 = vld [vmem:[#allocation2 + $0x3c8] sm:$0xff]
    %v181 = vld [vmem:[#allocation2 + $0x3d0] sm:$0xff]
    %v182 = vld [vmem:[#allocation2 + $0x3d8] sm:$0xff]
    %v183 = vld [vmem:[#allocation2 + $0x3e0] sm:$0xff]
    %v184 = vld [vmem:[#allocation2 + $0x3e8] sm:$0xff]
    %v185 = vld [vmem:[#allocation2 + $0x3f0] sm:$0xff]
    %v186 = vld [vmem:[#allocation2 + $0x3f8] sm:$0xff]
    %v187 = vld [vmem:[#allocation2 + $0x400] sm:$0xff]
    %v188 = vld [vmem:[#allocation2 + $0x408] sm:$0xff]
    %v189 = vld [vmem:[#allocation2 + $0x410] sm:$0xff]
    %v190 = vld [vmem:[#allocation2 + $0x418] sm:$0xff]
    %v191 = vld [vmem:[#allocation2 + $0x420] sm:$0xff]
    %v192 = vld [vmem:[#allocation2 + $0x428] sm:$0xff]
    %v193 = vld [vmem:[#allocation2 + $0x430] sm:$0xff]
    %v194 = vld [vmem:[#allocation2 + $0x438] sm:$0xff]
    %v195 = vld [vmem:[#allocation2 + $0x440] sm:$0xff]
    %v196 = vld [vmem:[#allocation2 + $0x448] sm:$0xff]
    %v197 = vld [vmem:[#allocation2 + $0x450] sm:$0xff]
    %v198 = vld [vmem:[#allocation2 + $0x458] sm:$0xff]
    %v199 = vld [vmem:[#allocation2 + $0x460] sm:$0xff]
    %v200 = vld [vmem:[#allocation2 + $0x468] sm:$0xff]
    %v201 = vld [vmem:[#allocation2 + $0x470] sm:$0xff]
    %v202 = vld [vmem:[#allocation2 + $0x478] sm:$0xff]
    %v203 = vld [vmem:[#allocation2 + $0x480] sm:$0xff]
    %v204 = vld [vmem:[#allocation2 + $0x488] sm:$0xff]
    %v205 = vld [vmem:[#allocation2 + $0x490] sm:$0xff]
    %v206 = vld [vmem:[#allocation2 + $0x498] sm:$0xff]
    %v207 = vld [vmem:[#allocation2 + $0x4a0] sm:$0xff]
    %v208 = vld [vmem:[#allocation2 + $0x4a8] sm:$0xff]
    %v209 = vld [vmem:[#allocation2 + $0x4b0] sm:$0xff]
    %v210 = vld [vmem:[#allocation2 + $0x4b8] sm:$0xff]
    %v211 = vld [vmem:[#allocation2 + $0x4c0] sm:$0xff]
    %v212 = vld [vmem:[#allocation2 + $0x4c8] sm:$0xff]
    %v213 = vld [vmem:[#allocation2 + $0x4d0] sm:$0xff]
    %v214 = vld [vmem:[#allocation2 + $0x4d8] sm:$0xff]
    %v215 = vld [vmem:[#allocation2 + $0x4e0] sm:$0xff]
    %v216 = vld [vmem:[#allocation2 + $0x4e8] sm:$0xff]
    %v217 = vld [vmem:[#allocation2 + $0x4f0] sm:$0xff]
    %v218 = vld [vmem:[#allocation2 + $0x4f8] sm:$0xff]
    %v219 = vld [vmem:[#allocation2 + $0x500] sm:$0xff]
    %v220 = vld [vmem:[#allocation2 + $0x508] sm:$0xff]
    %v221 = vld [vmem:[#allocation2 + $0x510] sm:$0xff]
    %v222 = vld [vmem:[#allocation2 + $0x518] sm:$0xff]
    %v223 = vld [vmem:[#allocation2 + $0x520] sm:$0xff]
    %v224 = vld [vmem:[#allocation2 + $0x528] sm:$0xff]
    %v225 = vld [vmem:[#allocation2 + $0x530] sm:$0xff]
    %v226 = vld [vmem:[#allocation2 + $0x538] sm:$0xff]
    %v227 = vld [vmem:[#allocation2 + $0x540] sm:$0xff]
    %v228 = vld [vmem:[#allocation2 + $0x548] sm:$0xff]
    %v229 = vld [vmem:[#allocation2 + $0x550] sm:$0xff]
    %v230 = vld [vmem:[#allocation2 + $0x558] sm:$0xff]
    %v231 = vld [vmem:[#allocation2 + $0x560] sm:$0xff]
    %v232 = vld [vmem:[#allocation2 + $0x568] sm:$0xff]
    %v233 = vld [vmem:[#allocation2 + $0x570] sm:$0xff]
    %v234 = vld [vmem:[#allocation2 + $0x578] sm:$0xff]
    %v235 = vld [vmem:[#allocation2 + $0x580] sm:$0xff]
    %v236 = vld [vmem:[#allocation2 + $0x588] sm:$0xff]
    %v237 = vld [vmem:[#allocation2 + $0x590] sm:$0xff]
    %v238 = vld [vmem:[#allocation2 + $0x598] sm:$0xff]
    %v239 = vld [vmem:[#allocation2 + $0x5a0] sm:$0xff]
    %v240 = vld [vmem:[#allocation2 + $0x5a8] sm:$0xff]
    %v241 = vld [vmem:[#allocation2 + $0x5b0] sm:$0xff]
    %v242 = vld [vmem:[#allocation2 + $0x5b8] sm:$0xff]
    %v243 = vld [vmem:[#allocation2 + $0x5c0] sm:$0xff]
    %v244 = vld [vmem:[#allocation2 + $0x5c8] sm:$0xff]
    %v245 = vld [vmem:[#allocation2 + $0x5d0] sm:$0xff]
    %v246 = vld [vmem:[#allocation2 + $0x5d8] sm:$0xff]
    %v247 = vld [vmem:[#allocation2 + $0x5e0] sm:$0xff]
    %v248 = vld [vmem:[#allocation2 + $0x5e8] sm:$0xff]
    %v249 = vld [vmem:[#allocation2 + $0x5f0] sm:$0xff]
    %v250 = vld [vmem:[#allocation2 + $0x5f8] sm:$0xff]
    %v251 = vld [vmem:[#allocation2 + $0x600] sm:$0xff]
    %v252 = vld [vmem:[#allocation2 + $0x608] sm:$0xff]
    %v253 = vld [vmem:[#allocation2 + $0x610] sm:$0xff]
    %v254 = vld [vmem:[#allocation2 + $0x618] sm:$0xff]
    %v255 = vld [vmem:[#allocation2 + $0x620] sm:$0xff]
    %v256 = vld [vmem:[#allocation2 + $0x628] sm:$0xff]
    %v257 = vld [vmem:[#allocation2 + $0x630] sm:$0xff]
    %v258 = vld [vmem:[#allocation2 + $0x638] sm:$0xff]
    %v259 = vld [vmem:[#allocation2 + $0x640] sm:$0xff]
    %v260 = vld [vmem:[#allocation2 + $0x648] sm:$0xff]
    %v261 = vld [vmem:[#allocation2 + $0x650] sm:$0xff]
    %v262 = vld [vmem:[#allocation2 + $0x658] sm:$0xff]
    %v263 = vld [vmem:[#allocation2 + $0x660] sm:$0xff]
    %v264 = vld [vmem:[#allocation2 + $0x668] sm:$0xff]
    %v265 = vld [vmem:[#allocation2 + $0x670] sm:$0xff]
    %v266 = vld [vmem:[#allocation2 + $0x678] sm:$0xff]
    %v267 = vld [vmem:[#allocation2 + $0x680] sm:$0xff]
    %v268 = vld [vmem:[#allocation2 + $0x688] sm:$0xff]
    %v269 = vld [vmem:[#allocation2 + $0x690] sm:$0xff]
    %v270 = vld [vmem:[#allocation2 + $0x698] sm:$0xff]
    %v271 = vld [vmem:[#allocation2 + $0x6a0] sm:$0xff]
    %v272 = vld [vmem:[#allocation2 + $0x6a8] sm:$0xff]
    %v273 = vld [vmem:[#allocation2 + $0x6b0] sm:$0xff]
    %v274 = vld [vmem:[#allocation2 + $0x6b8] sm:$0xff]
    %v275 = vld [vmem:[#allocation2 + $0x6c0] sm:$0xff]
    %v276 = vld [vmem:[#allocation2 + $0x6c8] sm:$0xff]
    %v277 = vld [vmem:[#allocation2 + $0x6d0] sm:$0xff]
    %v278 = vld [vmem:[#allocation2 + $0x6d8] sm:$0xff]
    %v279 = vld [vmem:[#allocation2 + $0x6e0] sm:$0xff]
    %v280 = vld [vmem:[#allocation2 + $0x6e8] sm:$0xff]
    %v281 = vld [vmem:[#allocation2 + $0x6f0] sm:$0xff]
    %v282 = vld [vmem:[#allocation2 + $0x6f8] sm:$0xff]
    %v283 = vld [vmem:[#allocation2 + $0x700] sm:$0xff]
    %v284 = vld [vmem:[#allocation2 + $0x708] sm:$0xff]
    %v285 = vld [vmem:[#allocation2 + $0x710] sm:$0xff]
    %v286 = vld [vmem:[#allocation2 + $0x718] sm:$0xff]
    %v287 = vld [vmem:[#allocation2 + $0x720] sm:$0xff]
    %v288 = vld [vmem:[#allocation2 + $0x728] sm:$0xff]
    %v289 = vld [vmem:[#allocation2 + $0x730] sm:$0xff]
    %v290 = vld [vmem:[#allocation2 + $0x738] sm:$0xff]
    %v291 = vld [vmem:[#allocation2 + $0x740] sm:$0xff]
    %v292 = vld [vmem:[#allocation2 + $0x748] sm:$0xff]
    %v293 = vld [vmem:[#allocation2 + $0x750] sm:$0xff]
    %v294 = vld [vmem:[#allocation2 + $0x758] sm:$0xff]
    %v295 = vld [vmem:[#allocation2 + $0x760] sm:$0xff]
    %v296 = vld [vmem:[#allocation2 + $0x768] sm:$0xff]
    %v297 = vld [vmem:[#allocation2 + $0x770] sm:$0xff]
    %v298 = vld [vmem:[#allocation2 + $0x778] sm:$0xff]
    %v299 = vld [vmem:[#allocation2 + $0x780] sm:$0xff]
    %v300 = vld [vmem:[#allocation2 + $0x788] sm:$0xff]
    %v301 = vld [vmem:[#allocation2 + $0x790] sm:$0xff]
    %v302 = vld [vmem:[#allocation2 + $0x798] sm:$0xff]
    %v303 = vld [vmem:[#allocation2 + $0x7a0] sm:$0xff]
    %v304 = vld [vmem:[#allocation2 + $0x7a8] sm:$0xff]
    %v305 = vld [vmem:[#allocation2 + $0x7b0] sm:$0xff]
    %v306 = vld [vmem:[#allocation2 + $0x7b8] sm:$0xff]
    %v307 = vld [vmem:[#allocation2 + $0x7c0] sm:$0xff]
    %v308 = vld [vmem:[#allocation2 + $0x7c8] sm:$0xff]
    %v309 = vld [vmem:[#allocation2 + $0x7d0] sm:$0xff]
    %v310 = vld [vmem:[#allocation2 + $0x7d8] sm:$0xff]
    %v311 = vld [vmem:[#allocation2 + $0x7e0] sm:$0xff]
    %v312 = vld [vmem:[#allocation2 + $0x7e8] sm:$0xff]
    %v313 = vld [vmem:[#allocation2 + $0x7f0] sm:$0xff]
    %v314 = vld [vmem:[#allocation2 + $0x7f8] sm:$0xff]
    %v315 = vld [vmem:[%s2] sm:$0xf]
    %v317 = vlaneseq
    %v318 = vshrl.u32 %v317, 7
    %v319 = vsub.s32 0, %v318
    %v320 = vrot.slane %v315, %v319
    %v321 = vlaneseq
    %v322 = vshrl.u32 %v321, 7
    %v323 = vsub.s32 1, %v322
    %v324 = vrot.slane %v315, %v323
    %v325 = vlaneseq
    %v326 = vshrl.u32 %v325, 7
    %v327 = vsub.s32 2, %v326
    %v328 = vrot.slane %v315, %v327
    %v329 = vlaneseq
    %v330 = vshrl.u32 %v329, 7
    %v331 = vsub.s32 3, %v330
    %v332 = vrot.slane %v315, %v331
    %v593 = vunpack.c.l.b16 %v59
    %v594 = vunpack.c.h.b16 %v59
    %v595 = vunpack.c.l.b16 %v60
    %v596 = vunpack.c.h.b16 %v60
    %v597 = vunpack.c.l.b16 %v61
    %v598 = vunpack.c.h.b16 %v61
    %v599 = vunpack.c.l.b16 %v62
    %v600 = vunpack.c.h.b16 %v62
    %v601 = vunpack.c.l.b16 %v63
    %v602 = vunpack.c.h.b16 %v63
    %v603 = vunpack.c.l.b16 %v64
    %v604 = vunpack.c.h.b16 %v64
    %v605 = vunpack.c.l.b16 %v65
    %v606 = vunpack.c.h.b16 %v65
    %v607 = vunpack.c.l.b16 %v66
    %v608 = vunpack.c.h.b16 %v66
    %v609 = vunpack.c.l.b16 %v67
    %v610 = vunpack.c.h.b16 %v67
    %v611 = vunpack.c.l.b16 %v68
    %v612 = vunpack.c.h.b16 %v68
    %v613 = vunpack.c.l.b16 %v69
    %v614 = vunpack.c.h.b16 %v69
    %v615 = vunpack.c.l.b16 %v70
    %v616 = vunpack.c.h.b16 %v70
    %v617 = vunpack.c.l.b16 %v71
    %v618 = vunpack.c.h.b16 %v71
    %v619 = vunpack.c.l.b16 %v72
    %v620 = vunpack.c.h.b16 %v72
    %v621 = vunpack.c.l.b16 %v73
    %v622 = vunpack.c.h.b16 %v73
    %v623 = vunpack.c.l.b16 %v74
    %v624 = vunpack.c.h.b16 %v74
    %v625 = vunpack.c.l.b16 %v75
    %v626 = vunpack.c.h.b16 %v75
    %v627 = vunpack.c.l.b16 %v76
    %v628 = vunpack.c.h.b16 %v76
    %v629 = vunpack.c.l.b16 %v77
    %v630 = vunpack.c.h.b16 %v77
    %v631 = vunpack.c.l.b16 %v78
    %v632 = vunpack.c.h.b16 %v78
    %v633 = vunpack.c.l.b16 %v79
    %v634 = vunpack.c.h.b16 %v79
    %v635 = vunpack.c.l.b16 %v80
    %v636 = vunpack.c.h.b16 %v80
    %v637 = vunpack.c.l.b16 %v81
    %v638 = vunpack.c.h.b16 %v81
    %v639 = vunpack.c.l.b16 %v82
    %v640 = vunpack.c.h.b16 %v82
    %v641 = vunpack.c.l.b16 %v83
    %v642 = vunpack.c.h.b16 %v83
    %v643 = vunpack.c.l.b16 %v84
    %v644 = vunpack.c.h.b16 %v84
    %v645 = vunpack.c.l.b16 %v85
    %v646 = vunpack.c.h.b16 %v85
    %v647 = vunpack.c.l.b16 %v86
    %v648 = vunpack.c.h.b16 %v86
    %v649 = vunpack.c.l.b16 %v87
    %v650 = vunpack.c.h.b16 %v87
    %v651 = vunpack.c.l.b16 %v88
    %v652 = vunpack.c.h.b16 %v88
    %v653 = vunpack.c.l.b16 %v89
    %v654 = vunpack.c.h.b16 %v89
    %v655 = vunpack.c.l.b16 %v90
    %v656 = vunpack.c.h.b16 %v90
    %v657 = vunpack.c.l.b16 %v91
    %v658 = vunpack.c.h.b16 %v91
    %v659 = vunpack.c.l.b16 %v92
    %v660 = vunpack.c.h.b16 %v92
    %v661 = vunpack.c.l.b16 %v93
    %v662 = vunpack.c.h.b16 %v93
    %v663 = vunpack.c.l.b16 %v94
    %v664 = vunpack.c.h.b16 %v94
    %v665 = vunpack.c.l.b16 %v95
    %v666 = vunpack.c.h.b16 %v95
    %v667 = vunpack.c.l.b16 %v96
    %v668 = vunpack.c.h.b16 %v96
    %v669 = vunpack.c.l.b16 %v97
    %v670 = vunpack.c.h.b16 %v97
    %v671 = vunpack.c.l.b16 %v98
    %v672 = vunpack.c.h.b16 %v98
    %v673 = vunpack.c.l.b16 %v99
    %v674 = vunpack.c.h.b16 %v99
    %v675 = vunpack.c.l.b16 %v100
    %v676 = vunpack.c.h.b16 %v100
    %v677 = vunpack.c.l.b16 %v101
    %v678 = vunpack.c.h.b16 %v101
    %v679 = vunpack.c.l.b16 %v102
    %v680 = vunpack.c.h.b16 %v102
    %v681 = vunpack.c.l.b16 %v103
    %v682 = vunpack.c.h.b16 %v103
    %v683 = vunpack.c.l.b16 %v104
    %v684 = vunpack.c.h.b16 %v104
    %v685 = vunpack.c.l.b16 %v105
    %v686 = vunpack.c.h.b16 %v105
    %v687 = vunpack.c.l.b16 %v106
    %v688 = vunpack.c.h.b16 %v106
    %v689 = vunpack.c.l.b16 %v107
    %v690 = vunpack.c.h.b16 %v107
    %v691 = vunpack.c.l.b16 %v108
    %v692 = vunpack.c.h.b16 %v108
    %v693 = vunpack.c.l.b16 %v109
    %v694 = vunpack.c.h.b16 %v109
    %v695 = vunpack.c.l.b16 %v110
    %v696 = vunpack.c.h.b16 %v110
    %v697 = vunpack.c.l.b16 %v111
    %v698 = vunpack.c.h.b16 %v111
    %v699 = vunpack.c.l.b16 %v112
    %v700 = vunpack.c.h.b16 %v112
    %v701 = vunpack.c.l.b16 %v113
    %v702 = vunpack.c.h.b16 %v113
    %v703 = vunpack.c.l.b16 %v114
    %v704 = vunpack.c.h.b16 %v114
    %v705 = vunpack.c.l.b16 %v115
    %v706 = vunpack.c.h.b16 %v115
    %v707 = vunpack.c.l.b16 %v116
    %v708 = vunpack.c.h.b16 %v116
    %v709 = vunpack.c.l.b16 %v117
    %v710 = vunpack.c.h.b16 %v117
    %v711 = vunpack.c.l.b16 %v118
    %v712 = vunpack.c.h.b16 %v118
    %v713 = vunpack.c.l.b16 %v119
    %v714 = vunpack.c.h.b16 %v119
    %v715 = vunpack.c.l.b16 %v120
    %v716 = vunpack.c.h.b16 %v120
    %v717 = vunpack.c.l.b16 %v121
    %v718 = vunpack.c.h.b16 %v121
    %v719 = vunpack.c.l.b16 %v122
    %v720 = vunpack.c.h.b16 %v122
    %v721 = vunpack.c.l.b16 %v123
    %v722 = vunpack.c.h.b16 %v123
    %v723 = vunpack.c.l.b16 %v124
    %v724 = vunpack.c.h.b16 %v124
    %v725 = vunpack.c.l.b16 %v125
    %v726 = vunpack.c.h.b16 %v125
    %v727 = vunpack.c.l.b16 %v126
    %v728 = vunpack.c.h.b16 %v126
    %v729 = vunpack.c.l.b16 %v127
    %v730 = vunpack.c.h.b16 %v127
    %v731 = vunpack.c.l.b16 %v128
    %v732 = vunpack.c.h.b16 %v128
    %v733 = vunpack.c.l.b16 %v129
    %v734 = vunpack.c.h.b16 %v129
    %v735 = vunpack.c.l.b16 %v130
    %v736 = vunpack.c.h.b16 %v130
    %v737 = vunpack.c.l.b16 %v131
    %v738 = vunpack.c.h.b16 %v131
    %v739 = vunpack.c.l.b16 %v132
    %v740 = vunpack.c.h.b16 %v132
    %v741 = vunpack.c.l.b16 %v133
    %v742 = vunpack.c.h.b16 %v133
    %v743 = vunpack.c.l.b16 %v134
    %v744 = vunpack.c.h.b16 %v134
    %v745 = vunpack.c.l.b16 %v135
    %v746 = vunpack.c.h.b16 %v135
    %v747 = vunpack.c.l.b16 %v136
    %v748 = vunpack.c.h.b16 %v136
    %v749 = vunpack.c.l.b16 %v137
    %v750 = vunpack.c.h.b16 %v137
    %v751 = vunpack.c.l.b16 %v138
    %v752 = vunpack.c.h.b16 %v138
    %v753 = vunpack.c.l.b16 %v139
    %v754 = vunpack.c.h.b16 %v139
    %v755 = vunpack.c.l.b16 %v140
    %v756 = vunpack.c.h.b16 %v140
    %v757 = vunpack.c.l.b16 %v141
    %v758 = vunpack.c.h.b16 %v141
    %v759 = vunpack.c.l.b16 %v142
    %v760 = vunpack.c.h.b16 %v142
    %v761 = vunpack.c.l.b16 %v143
    %v762 = vunpack.c.h.b16 %v143
    %v763 = vunpack.c.l.b16 %v144
    %v764 = vunpack.c.h.b16 %v144
    %v765 = vunpack.c.l.b16 %v145
    %v766 = vunpack.c.h.b16 %v145
    %v767 = vunpack.c.l.b16 %v146
    %v768 = vunpack.c.h.b16 %v146
    %v769 = vunpack.c.l.b16 %v147
    %v770 = vunpack.c.h.b16 %v147
    %v771 = vunpack.c.l.b16 %v148
    %v772 = vunpack.c.h.b16 %v148
    %v773 = vunpack.c.l.b16 %v149
    %v774 = vunpack.c.h.b16 %v149
    %v775 = vunpack.c.l.b16 %v150
    %v776 = vunpack.c.h.b16 %v150
    %v777 = vunpack.c.l.b16 %v151
    %v778 = vunpack.c.h.b16 %v151
    %v779 = vunpack.c.l.b16 %v152
    %v780 = vunpack.c.h.b16 %v152
    %v781 = vunpack.c.l.b16 %v153
    %v782 = vunpack.c.h.b16 %v153
    %v783 = vunpack.c.l.b16 %v154
    %v784 = vunpack.c.h.b16 %v154
    %v785 = vunpack.c.l.b16 %v155
    %v786 = vunpack.c.h.b16 %v155
    %v787 = vunpack.c.l.b16 %v156
    %v788 = vunpack.c.h.b16 %v156
    %v789 = vunpack.c.l.b16 %v157
    %v790 = vunpack.c.h.b16 %v157
    %v791 = vunpack.c.l.b16 %v158
    %v792 = vunpack.c.h.b16 %v158
    %v793 = vunpack.c.l.b16 %v159
    %v794 = vunpack.c.h.b16 %v159
    %v795 = vunpack.c.l.b16 %v160
    %v796 = vunpack.c.h.b16 %v160
    %v797 = vunpack.c.l.b16 %v161
    %v798 = vunpack.c.h.b16 %v161
    %v799 = vunpack.c.l.b16 %v162
    %v800 = vunpack.c.h.b16 %v162
    %v801 = vunpack.c.l.b16 %v163
    %v802 = vunpack.c.h.b16 %v163
    %v803 = vunpack.c.l.b16 %v164
    %v804 = vunpack.c.h.b16 %v164
    %v805 = vunpack.c.l.b16 %v165
    %v806 = vunpack.c.h.b16 %v165
    %v807 = vunpack.c.l.b16 %v166
    %v808 = vunpack.c.h.b16 %v166
    %v809 = vunpack.c.l.b16 %v167
    %v810 = vunpack.c.h.b16 %v167
    %v811 = vunpack.c.l.b16 %v168
    %v812 = vunpack.c.h.b16 %v168
    %v813 = vunpack.c.l.b16 %v169
    %v814 = vunpack.c.h.b16 %v169
    %v815 = vunpack.c.l.b16 %v170
    %v816 = vunpack.c.h.b16 %v170
    %v817 = vunpack.c.l.b16 %v171
    %v818 = vunpack.c.h.b16 %v171
    %v819 = vunpack.c.l.b16 %v172
    %v820 = vunpack.c.h.b16 %v172
    %v821 = vunpack.c.l.b16 %v173
    %v822 = vunpack.c.h.b16 %v173
    %v823 = vunpack.c.l.b16 %v174
    %v824 = vunpack.c.h.b16 %v174
    %v825 = vunpack.c.l.b16 %v175
    %v826 = vunpack.c.h.b16 %v175
    %v827 = vunpack.c.l.b16 %v176
    %v828 = vunpack.c.h.b16 %v176
    %v829 = vunpack.c.l.b16 %v177
    %v830 = vunpack.c.h.b16 %v177
    %v831 = vunpack.c.l.b16 %v178
    %v832 = vunpack.c.h.b16 %v178
    %v833 = vunpack.c.l.b16 %v179
    %v834 = vunpack.c.h.b16 %v179
    %v835 = vunpack.c.l.b16 %v180
    %v836 = vunpack.c.h.b16 %v180
    %v837 = vunpack.c.l.b16 %v181
    %v838 = vunpack.c.h.b16 %v181
    %v839 = vunpack.c.l.b16 %v182
    %v840 = vunpack.c.h.b16 %v182
    %v841 = vunpack.c.l.b16 %v183
    %v842 = vunpack.c.h.b16 %v183
    %v843 = vunpack.c.l.b16 %v184
    %v844 = vunpack.c.h.b16 %v184
    %v845 = vunpack.c.l.b16 %v185
    %v846 = vunpack.c.h.b16 %v185
    %v847 = vunpack.c.l.b16 %v186
    %v848 = vunpack.c.h.b16 %v186
    %v849 = vunpack.c.l.b16 %v187
    %v850 = vunpack.c.h.b16 %v187
    %v851 = vunpack.c.l.b16 %v188
    %v852 = vunpack.c.h.b16 %v188
    %v853 = vunpack.c.l.b16 %v189
    %v854 = vunpack.c.h.b16 %v189
    %v855 = vunpack.c.l.b16 %v190
    %v856 = vunpack.c.h.b16 %v190
    %v857 = vunpack.c.l.b16 %v191
    %v858 = vunpack.c.h.b16 %v191
    %v859 = vunpack.c.l.b16 %v192
    %v860 = vunpack.c.h.b16 %v192
    %v861 = vunpack.c.l.b16 %v193
    %v862 = vunpack.c.h.b16 %v193
    %v863 = vunpack.c.l.b16 %v194
    %v864 = vunpack.c.h.b16 %v194
    %v865 = vunpack.c.l.b16 %v195
    %v866 = vunpack.c.h.b16 %v195
    %v867 = vunpack.c.l.b16 %v196
    %v868 = vunpack.c.h.b16 %v196
    %v869 = vunpack.c.l.b16 %v197
    %v870 = vunpack.c.h.b16 %v197
    %v871 = vunpack.c.l.b16 %v198
    %v872 = vunpack.c.h.b16 %v198
    %v873 = vunpack.c.l.b16 %v199
    %v874 = vunpack.c.h.b16 %v199
    %v875 = vunpack.c.l.b16 %v200
    %v876 = vunpack.c.h.b16 %v200
    %v877 = vunpack.c.l.b16 %v201
    %v878 = vunpack.c.h.b16 %v201
    %v879 = vunpack.c.l.b16 %v202
    %v880 = vunpack.c.h.b16 %v202
    %v881 = vunpack.c.l.b16 %v203
    %v882 = vunpack.c.h.b16 %v203
    %v883 = vunpack.c.l.b16 %v204
    %v884 = vunpack.c.h.b16 %v204
    %v885 = vunpack.c.l.b16 %v205
    %v886 = vunpack.c.h.b16 %v205
    %v887 = vunpack.c.l.b16 %v206
    %v888 = vunpack.c.h.b16 %v206
    %v889 = vunpack.c.l.b16 %v207
    %v890 = vunpack.c.h.b16 %v207
    %v891 = vunpack.c.l.b16 %v208
    %v892 = vunpack.c.h.b16 %v208
    %v893 = vunpack.c.l.b16 %v209
    %v894 = vunpack.c.h.b16 %v209
    %v895 = vunpack.c.l.b16 %v210
    %v896 = vunpack.c.h.b16 %v210
    %v897 = vunpack.c.l.b16 %v211
    %v898 = vunpack.c.h.b16 %v211
    %v899 = vunpack.c.l.b16 %v212
    %v900 = vunpack.c.h.b16 %v212
    %v901 = vunpack.c.l.b16 %v213
    %v902 = vunpack.c.h.b16 %v213
    %v903 = vunpack.c.l.b16 %v214
    %v904 = vunpack.c.h.b16 %v214
    %v905 = vunpack.c.l.b16 %v215
    %v906 = vunpack.c.h.b16 %v215
    %v907 = vunpack.c.l.b16 %v216
    %v908 = vunpack.c.h.b16 %v216
    %v909 = vunpack.c.l.b16 %v217
    %v910 = vunpack.c.h.b16 %v217
    %v911 = vunpack.c.l.b16 %v218
    %v912 = vunpack.c.h.b16 %v218
    %v913 = vunpack.c.l.b16 %v219
    %v914 = vunpack.c.h.b16 %v219
    %v915 = vunpack.c.l.b16 %v220
    %v916 = vunpack.c.h.b16 %v220
    %v917 = vunpack.c.l.b16 %v221
    %v918 = vunpack.c.h.b16 %v221
    %v919 = vunpack.c.l.b16 %v222
    %v920 = vunpack.c.h.b16 %v222
    %v921 = vunpack.c.l.b16 %v223
    %v922 = vunpack.c.h.b16 %v223
    %v923 = vunpack.c.l.b16 %v224
    %v924 = vunpack.c.h.b16 %v224
    %v925 = vunpack.c.l.b16 %v225
    %v926 = vunpack.c.h.b16 %v225
    %v927 = vunpack.c.l.b16 %v226
    %v928 = vunpack.c.h.b16 %v226
    %v929 = vunpack.c.l.b16 %v227
    %v930 = vunpack.c.h.b16 %v227
    %v931 = vunpack.c.l.b16 %v228
    %v932 = vunpack.c.h.b16 %v228
    %v933 = vunpack.c.l.b16 %v229
    %v934 = vunpack.c.h.b16 %v229
    %v935 = vunpack.c.l.b16 %v230
    %v936 = vunpack.c.h.b16 %v230
    %v937 = vunpack.c.l.b16 %v231
    %v938 = vunpack.c.h.b16 %v231
    %v939 = vunpack.c.l.b16 %v232
    %v940 = vunpack.c.h.b16 %v232
    %v941 = vunpack.c.l.b16 %v233
    %v942 = vunpack.c.h.b16 %v233
    %v943 = vunpack.c.l.b16 %v234
    %v944 = vunpack.c.h.b16 %v234
    %v945 = vunpack.c.l.b16 %v235
    %v946 = vunpack.c.h.b16 %v235
    %v947 = vunpack.c.l.b16 %v236
    %v948 = vunpack.c.h.b16 %v236
    %v949 = vunpack.c.l.b16 %v237
    %v950 = vunpack.c.h.b16 %v237
    %v951 = vunpack.c.l.b16 %v238
    %v952 = vunpack.c.h.b16 %v238
    %v953 = vunpack.c.l.b16 %v239
    %v954 = vunpack.c.h.b16 %v239
    %v955 = vunpack.c.l.b16 %v240
    %v956 = vunpack.c.h.b16 %v240
    %v957 = vunpack.c.l.b16 %v241
    %v958 = vunpack.c.h.b16 %v241
    %v959 = vunpack.c.l.b16 %v242
    %v960 = vunpack.c.h.b16 %v242
    %v961 = vunpack.c.l.b16 %v243
    %v962 = vunpack.c.h.b16 %v243
    %v963 = vunpack.c.l.b16 %v244
    %v964 = vunpack.c.h.b16 %v244
    %v965 = vunpack.c.l.b16 %v245
    %v966 = vunpack.c.h.b16 %v245
    %v967 = vunpack.c.l.b16 %v246
    %v968 = vunpack.c.h.b16 %v246
    %v969 = vunpack.c.l.b16 %v247
    %v970 = vunpack.c.h.b16 %v247
    %v971 = vunpack.c.l.b16 %v248
    %v972 = vunpack.c.h.b16 %v248
    %v973 = vunpack.c.l.b16 %v249
    %v974 = vunpack.c.h.b16 %v249
    %v975 = vunpack.c.l.b16 %v250
    %v976 = vunpack.c.h.b16 %v250
    %v977 = vunpack.c.l.b16 %v251
    %v978 = vunpack.c.h.b16 %v251
    %v979 = vunpack.c.l.b16 %v252
    %v980 = vunpack.c.h.b16 %v252
    %v981 = vunpack.c.l.b16 %v253
    %v982 = vunpack.c.h.b16 %v253
    %v983 = vunpack.c.l.b16 %v254
    %v984 = vunpack.c.h.b16 %v254
    %v985 = vunpack.c.l.b16 %v255
    %v986 = vunpack.c.h.b16 %v255
    %v987 = vunpack.c.l.b16 %v256
    %v988 = vunpack.c.h.b16 %v256
    %v989 = vunpack.c.l.b16 %v257
    %v990 = vunpack.c.h.b16 %v257
    %v991 = vunpack.c.l.b16 %v258
    %v992 = vunpack.c.h.b16 %v258
    %v993 = vunpack.c.l.b16 %v259
    %v994 = vunpack.c.h.b16 %v259
    %v995 = vunpack.c.l.b16 %v260
    %v996 = vunpack.c.h.b16 %v260
    %v997 = vunpack.c.l.b16 %v261
    %v998 = vunpack.c.h.b16 %v261
    %v999 = vunpack.c.l.b16 %v262
    %v1000 = vunpack.c.h.b16 %v262
    %v1001 = vunpack.c.l.b16 %v263
    %v1002 = vunpack.c.h.b16 %v263
    %v1003 = vunpack.c.l.b16 %v264
    %v1004 = vunpack.c.h.b16 %v264
    %v1005 = vunpack.c.l.b16 %v265
    %v1006 = vunpack.c.h.b16 %v265
    %v1007 = vunpack.c.l.b16 %v266
    %v1008 = vunpack.c.h.b16 %v266
    %v1009 = vunpack.c.l.b16 %v267
    %v1010 = vunpack.c.h.b16 %v267
    %v1011 = vunpack.c.l.b16 %v268
    %v1012 = vunpack.c.h.b16 %v268
    %v1013 = vunpack.c.l.b16 %v269
    %v1014 = vunpack.c.h.b16 %v269
    %v1015 = vunpack.c.l.b16 %v270
    %v1016 = vunpack.c.h.b16 %v270
    %v1017 = vunpack.c.l.b16 %v271
    %v1018 = vunpack.c.h.b16 %v271
    %v1019 = vunpack.c.l.b16 %v272
    %v1020 = vunpack.c.h.b16 %v272
    %v1021 = vunpack.c.l.b16 %v273
    %v1022 = vunpack.c.h.b16 %v273
    %v1023 = vunpack.c.l.b16 %v274
    %v1024 = vunpack.c.h.b16 %v274
    %v1025 = vunpack.c.l.b16 %v275
    %v1026 = vunpack.c.h.b16 %v275
    %v1027 = vunpack.c.l.b16 %v276
    %v1028 = vunpack.c.h.b16 %v276
    %v1029 = vunpack.c.l.b16 %v277
    %v1030 = vunpack.c.h.b16 %v277
    %v1031 = vunpack.c.l.b16 %v278
    %v1032 = vunpack.c.h.b16 %v278
    %v1033 = vunpack.c.l.b16 %v279
    %v1034 = vunpack.c.h.b16 %v279
    %v1035 = vunpack.c.l.b16 %v280
    %v1036 = vunpack.c.h.b16 %v280
    %v1037 = vunpack.c.l.b16 %v281
    %v1038 = vunpack.c.h.b16 %v281
    %v1039 = vunpack.c.l.b16 %v282
    %v1040 = vunpack.c.h.b16 %v282
    %v1041 = vunpack.c.l.b16 %v283
    %v1042 = vunpack.c.h.b16 %v283
    %v1043 = vunpack.c.l.b16 %v284
    %v1044 = vunpack.c.h.b16 %v284
    %v1045 = vunpack.c.l.b16 %v285
    %v1046 = vunpack.c.h.b16 %v285
    %v1047 = vunpack.c.l.b16 %v286
    %v1048 = vunpack.c.h.b16 %v286
    %v1049 = vunpack.c.l.b16 %v287
    %v1050 = vunpack.c.h.b16 %v287
    %v1051 = vunpack.c.l.b16 %v288
    %v1052 = vunpack.c.h.b16 %v288
    %v1053 = vunpack.c.l.b16 %v289
    %v1054 = vunpack.c.h.b16 %v289
    %v1055 = vunpack.c.l.b16 %v290
    %v1056 = vunpack.c.h.b16 %v290
    %v1057 = vunpack.c.l.b16 %v291
    %v1058 = vunpack.c.h.b16 %v291
    %v1059 = vunpack.c.l.b16 %v292
    %v1060 = vunpack.c.h.b16 %v292
    %v1061 = vunpack.c.l.b16 %v293
    %v1062 = vunpack.c.h.b16 %v293
    %v1063 = vunpack.c.l.b16 %v294
    %v1064 = vunpack.c.h.b16 %v294
    %v1065 = vunpack.c.l.b16 %v295
    %v1066 = vunpack.c.h.b16 %v295
    %v1067 = vunpack.c.l.b16 %v296
    %v1068 = vunpack.c.h.b16 %v296
    %v1069 = vunpack.c.l.b16 %v297
    %v1070 = vunpack.c.h.b16 %v297
    %v1071 = vunpack.c.l.b16 %v298
    %v1072 = vunpack.c.h.b16 %v298
    %v1073 = vunpack.c.l.b16 %v299
    %v1074 = vunpack.c.h.b16 %v299
    %v1075 = vunpack.c.l.b16 %v300
    %v1076 = vunpack.c.h.b16 %v300
    %v1077 = vunpack.c.l.b16 %v301
    %v1078 = vunpack.c.h.b16 %v301
    %v1079 = vunpack.c.l.b16 %v302
    %v1080 = vunpack.c.h.b16 %v302
    %v1081 = vunpack.c.l.b16 %v303
    %v1082 = vunpack.c.h.b16 %v303
    %v1083 = vunpack.c.l.b16 %v304
    %v1084 = vunpack.c.h.b16 %v304
    %v1085 = vunpack.c.l.b16 %v305
    %v1086 = vunpack.c.h.b16 %v305
    %v1087 = vunpack.c.l.b16 %v306
    %v1088 = vunpack.c.h.b16 %v306
    %v1089 = vunpack.c.l.b16 %v307
    %v1090 = vunpack.c.h.b16 %v307
    %v1091 = vunpack.c.l.b16 %v308
    %v1092 = vunpack.c.h.b16 %v308
    %v1093 = vunpack.c.l.b16 %v309
    %v1094 = vunpack.c.h.b16 %v309
    %v1095 = vunpack.c.l.b16 %v310
    %v1096 = vunpack.c.h.b16 %v310
    %v1097 = vunpack.c.l.b16 %v311
    %v1098 = vunpack.c.h.b16 %v311
    %v1099 = vunpack.c.l.b16 %v312
    %v1100 = vunpack.c.h.b16 %v312
    %v1101 = vunpack.c.l.b16 %v313
    %v1102 = vunpack.c.h.b16 %v313
    %v1103 = vunpack.c.l.b16 %v314
    %v1104 = vunpack.c.h.b16 %v314
    %v1105 = vpack.c.b16 %v597, %v593
    %v1106 = vpack.c.b16 %v598, %v594
    %v1107 = vpack.c.b16 %v599, %v595
    %v1108 = vpack.c.b16 %v600, %v596
    %v1109 = vpack.c.b16 %v605, %v601
    %v1110 = vpack.c.b16 %v606, %v602
    %v1111 = vpack.c.b16 %v607, %v603
    %v1112 = vpack.c.b16 %v608, %v604
    %v1113 = vpack.c.b16 %v613, %v609
    %v1114 = vpack.c.b16 %v614, %v610
    %v1115 = vpack.c.b16 %v615, %v611
    %v1116 = vpack.c.b16 %v616, %v612
    %v1117 = vpack.c.b16 %v621, %v617
    %v1118 = vpack.c.b16 %v622, %v618
    %v1119 = vpack.c.b16 %v623, %v619
    %v1120 = vpack.c.b16 %v624, %v620
    %v1121 = vpack.c.b16 %v629, %v625
    %v1122 = vpack.c.b16 %v630, %v626
    %v1123 = vpack.c.b16 %v631, %v627
    %v1124 = vpack.c.b16 %v632, %v628
    %v1125 = vpack.c.b16 %v637, %v633
    %v1126 = vpack.c.b16 %v638, %v634
    %v1127 = vpack.c.b16 %v639, %v635
    %v1128 = vpack.c.b16 %v640, %v636
    %v1129 = vpack.c.b16 %v645, %v641
    %v1130 = vpack.c.b16 %v646, %v642
    %v1131 = vpack.c.b16 %v647, %v643
    %v1132 = vpack.c.b16 %v648, %v644
    %v1133 = vpack.c.b16 %v653, %v649
    %v1134 = vpack.c.b16 %v654, %v650
    %v1135 = vpack.c.b16 %v655, %v651
    %v1136 = vpack.c.b16 %v656, %v652
    %v1137 = vpack.c.b16 %v661, %v657
    %v1138 = vpack.c.b16 %v662, %v658
    %v1139 = vpack.c.b16 %v663, %v659
    %v1140 = vpack.c.b16 %v664, %v660
    %v1141 = vpack.c.b16 %v669, %v665
    %v1142 = vpack.c.b16 %v670, %v666
    %v1143 = vpack.c.b16 %v671, %v667
    %v1144 = vpack.c.b16 %v672, %v668
    %v1145 = vpack.c.b16 %v677, %v673
    %v1146 = vpack.c.b16 %v678, %v674
    %v1147 = vpack.c.b16 %v679, %v675
    %v1148 = vpack.c.b16 %v680, %v676
    %v1149 = vpack.c.b16 %v685, %v681
    %v1150 = vpack.c.b16 %v686, %v682
    %v1151 = vpack.c.b16 %v687, %v683
    %v1152 = vpack.c.b16 %v688, %v684
    %v1153 = vpack.c.b16 %v693, %v689
    %v1154 = vpack.c.b16 %v694, %v690
    %v1155 = vpack.c.b16 %v695, %v691
    %v1156 = vpack.c.b16 %v696, %v692
    %v1157 = vpack.c.b16 %v701, %v697
    %v1158 = vpack.c.b16 %v702, %v698
    %v1159 = vpack.c.b16 %v703, %v699
    %v1160 = vpack.c.b16 %v704, %v700
    %v1161 = vpack.c.b16 %v709, %v705
    %v1162 = vpack.c.b16 %v710, %v706
    %v1163 = vpack.c.b16 %v711, %v707
    %v1164 = vpack.c.b16 %v712, %v708
    %v1165 = vpack.c.b16 %v717, %v713
    %v1166 = vpack.c.b16 %v718, %v714
    %v1167 = vpack.c.b16 %v719, %v715
    %v1168 = vpack.c.b16 %v720, %v716
    %v1169 = vpack.c.b16 %v725, %v721
    %v1170 = vpack.c.b16 %v726, %v722
    %v1171 = vpack.c.b16 %v727, %v723
    %v1172 = vpack.c.b16 %v728, %v724
    %v1173 = vpack.c.b16 %v733, %v729
    %v1174 = vpack.c.b16 %v734, %v730
    %v1175 = vpack.c.b16 %v735, %v731
    %v1176 = vpack.c.b16 %v736, %v732
    %v1177 = vpack.c.b16 %v741, %v737
    %v1178 = vpack.c.b16 %v742, %v738
    %v1179 = vpack.c.b16 %v743, %v739
    %v1180 = vpack.c.b16 %v744, %v740
    %v1181 = vpack.c.b16 %v749, %v745
    %v1182 = vpack.c.b16 %v750, %v746
    %v1183 = vpack.c.b16 %v751, %v747
    %v1184 = vpack.c.b16 %v752, %v748
    %v1185 = vpack.c.b16 %v757, %v753
    %v1186 = vpack.c.b16 %v758, %v754
    %v1187 = vpack.c.b16 %v759, %v755
    %v1188 = vpack.c.b16 %v760, %v756
    %v1189 = vpack.c.b16 %v765, %v761
    %v1190 = vpack.c.b16 %v766, %v762
    %v1191 = vpack.c.b16 %v767, %v763
    %v1192 = vpack.c.b16 %v768, %v764
    %v1193 = vpack.c.b16 %v773, %v769
    %v1194 = vpack.c.b16 %v774, %v770
    %v1195 = vpack.c.b16 %v775, %v771
    %v1196 = vpack.c.b16 %v776, %v772
    %v1197 = vpack.c.b16 %v781, %v777
    %v1198 = vpack.c.b16 %v782, %v778
    %v1199 = vpack.c.b16 %v783, %v779
    %v1200 = vpack.c.b16 %v784, %v780
    %v1201 = vpack.c.b16 %v789, %v785
    %v1202 = vpack.c.b16 %v790, %v786
    %v1203 = vpack.c.b16 %v791, %v787
    %v1204 = vpack.c.b16 %v792, %v788
    %v1205 = vpack.c.b16 %v797, %v793
    %v1206 = vpack.c.b16 %v798, %v794
    %v1207 = vpack.c.b16 %v799, %v795
    %v1208 = vpack.c.b16 %v800, %v796
    %v1209 = vpack.c.b16 %v805, %v801
    %v1210 = vpack.c.b16 %v806, %v802
    %v1211 = vpack.c.b16 %v807, %v803
    %v1212 = vpack.c.b16 %v808, %v804
    %v1213 = vpack.c.b16 %v813, %v809
    %v1214 = vpack.c.b16 %v814, %v810
    %v1215 = vpack.c.b16 %v815, %v811
    %v1216 = vpack.c.b16 %v816, %v812
    %v1217 = vpack.c.b16 %v821, %v817
    %v1218 = vpack.c.b16 %v822, %v818
    %v1219 = vpack.c.b16 %v823, %v819
    %v1220 = vpack.c.b16 %v824, %v820
    %v1221 = vpack.c.b16 %v829, %v825
    %v1222 = vpack.c.b16 %v830, %v826
    %v1223 = vpack.c.b16 %v831, %v827
    %v1224 = vpack.c.b16 %v832, %v828
    %v1225 = vpack.c.b16 %v837, %v833
    %v1226 = vpack.c.b16 %v838, %v834
    %v1227 = vpack.c.b16 %v839, %v835
    %v1228 = vpack.c.b16 %v840, %v836
    %v1229 = vpack.c.b16 %v845, %v841
    %v1230 = vpack.c.b16 %v846, %v842
    %v1231 = vpack.c.b16 %v847, %v843
    %v1232 = vpack.c.b16 %v848, %v844
    %v1233 = vpack.c.b16 %v853, %v849
    %v1234 = vpack.c.b16 %v854, %v850
    %v1235 = vpack.c.b16 %v855, %v851
    %v1236 = vpack.c.b16 %v856, %v852
    %v1237 = vpack.c.b16 %v861, %v857
    %v1238 = vpack.c.b16 %v862, %v858
    %v1239 = vpack.c.b16 %v863, %v859
    %v1240 = vpack.c.b16 %v864, %v860
    %v1241 = vpack.c.b16 %v869, %v865
    %v1242 = vpack.c.b16 %v870, %v866
    %v1243 = vpack.c.b16 %v871, %v867
    %v1244 = vpack.c.b16 %v872, %v868
    %v1245 = vpack.c.b16 %v877, %v873
    %v1246 = vpack.c.b16 %v878, %v874
    %v1247 = vpack.c.b16 %v879, %v875
    %v1248 = vpack.c.b16 %v880, %v876
    %v1249 = vpack.c.b16 %v885, %v881
    %v1250 = vpack.c.b16 %v886, %v882
    %v1251 = vpack.c.b16 %v887, %v883
    %v1252 = vpack.c.b16 %v888, %v884
    %v1253 = vpack.c.b16 %v893, %v889
    %v1254 = vpack.c.b16 %v894, %v890
    %v1255 = vpack.c.b16 %v895, %v891
    %v1256 = vpack.c.b16 %v896, %v892
    %v1257 = vpack.c.b16 %v901, %v897
    %v1258 = vpack.c.b16 %v902, %v898
    %v1259 = vpack.c.b16 %v903, %v899
    %v1260 = vpack.c.b16 %v904, %v900
    %v1261 = vpack.c.b16 %v909, %v905
    %v1262 = vpack.c.b16 %v910, %v906
    %v1263 = vpack.c.b16 %v911, %v907
    %v1264 = vpack.c.b16 %v912, %v908
    %v1265 = vpack.c.b16 %v917, %v913
    %v1266 = vpack.c.b16 %v918, %v914
    %v1267 = vpack.c.b16 %v919, %v915
    %v1268 = vpack.c.b16 %v920, %v916
    %v1269 = vpack.c.b16 %v925, %v921
    %v1270 = vpack.c.b16 %v926, %v922
    %v1271 = vpack.c.b16 %v927, %v923
    %v1272 = vpack.c.b16 %v928, %v924
    %v1273 = vpack.c.b16 %v933, %v929
    %v1274 = vpack.c.b16 %v934, %v930
    %v1275 = vpack.c.b16 %v935, %v931
    %v1276 = vpack.c.b16 %v936, %v932
    %v1277 = vpack.c.b16 %v941, %v937
    %v1278 = vpack.c.b16 %v942, %v938
    %v1279 = vpack.c.b16 %v943, %v939
    %v1280 = vpack.c.b16 %v944, %v940
    %v1281 = vpack.c.b16 %v949, %v945
    %v1282 = vpack.c.b16 %v950, %v946
    %v1283 = vpack.c.b16 %v951, %v947
    %v1284 = vpack.c.b16 %v952, %v948
    %v1285 = vpack.c.b16 %v957, %v953
    %v1286 = vpack.c.b16 %v958, %v954
    %v1287 = vpack.c.b16 %v959, %v955
    %v1288 = vpack.c.b16 %v960, %v956
    %v1289 = vpack.c.b16 %v965, %v961
    %v1290 = vpack.c.b16 %v966, %v962
    %v1291 = vpack.c.b16 %v967, %v963
    %v1292 = vpack.c.b16 %v968, %v964
    %v1293 = vpack.c.b16 %v973, %v969
    %v1294 = vpack.c.b16 %v974, %v970
    %v1295 = vpack.c.b16 %v975, %v971
    %v1296 = vpack.c.b16 %v976, %v972
    %v1297 = vpack.c.b16 %v981, %v977
    %v1298 = vpack.c.b16 %v982, %v978
    %v1299 = vpack.c.b16 %v983, %v979
    %v1300 = vpack.c.b16 %v984, %v980
    %v1301 = vpack.c.b16 %v989, %v985
    %v1302 = vpack.c.b16 %v990, %v986
    %v1303 = vpack.c.b16 %v991, %v987
    %v1304 = vpack.c.b16 %v992, %v988
    %v1305 = vpack.c.b16 %v997, %v993
    %v1306 = vpack.c.b16 %v998, %v994
    %v1307 = vpack.c.b16 %v999, %v995
    %v1308 = vpack.c.b16 %v1000, %v996
    %v1309 = vpack.c.b16 %v1005, %v1001
    %v1310 = vpack.c.b16 %v1006, %v1002
    %v1311 = vpack.c.b16 %v1007, %v1003
    %v1312 = vpack.c.b16 %v1008, %v1004
    %v1313 = vpack.c.b16 %v1013, %v1009
    %v1314 = vpack.c.b16 %v1014, %v1010
    %v1315 = vpack.c.b16 %v1015, %v1011
    %v1316 = vpack.c.b16 %v1016, %v1012
    %v1317 = vpack.c.b16 %v1021, %v1017
    %v1318 = vpack.c.b16 %v1022, %v1018
    %v1319 = vpack.c.b16 %v1023, %v1019
    %v1320 = vpack.c.b16 %v1024, %v1020
    %v1321 = vpack.c.b16 %v1029, %v1025
    %v1322 = vpack.c.b16 %v1030, %v1026
    %v1323 = vpack.c.b16 %v1031, %v1027
    %v1324 = vpack.c.b16 %v1032, %v1028
    %v1325 = vpack.c.b16 %v1037, %v1033
    %v1326 = vpack.c.b16 %v1038, %v1034
    %v1327 = vpack.c.b16 %v1039, %v1035
    %v1328 = vpack.c.b16 %v1040, %v1036
    %v1329 = vpack.c.b16 %v1045, %v1041
    %v1330 = vpack.c.b16 %v1046, %v1042
    %v1331 = vpack.c.b16 %v1047, %v1043
    %v1332 = vpack.c.b16 %v1048, %v1044
    %v1333 = vpack.c.b16 %v1053, %v1049
    %v1334 = vpack.c.b16 %v1054, %v1050
    %v1335 = vpack.c.b16 %v1055, %v1051
    %v1336 = vpack.c.b16 %v1056, %v1052
    %v1337 = vpack.c.b16 %v1061, %v1057
    %v1338 = vpack.c.b16 %v1062, %v1058
    %v1339 = vpack.c.b16 %v1063, %v1059
    %v1340 = vpack.c.b16 %v1064, %v1060
    %v1341 = vpack.c.b16 %v1069, %v1065
    %v1342 = vpack.c.b16 %v1070, %v1066
    %v1343 = vpack.c.b16 %v1071, %v1067
    %v1344 = vpack.c.b16 %v1072, %v1068
    %v1345 = vpack.c.b16 %v1077, %v1073
    %v1346 = vpack.c.b16 %v1078, %v1074
    %v1347 = vpack.c.b16 %v1079, %v1075
    %v1348 = vpack.c.b16 %v1080, %v1076
    %v1349 = vpack.c.b16 %v1085, %v1081
    %v1350 = vpack.c.b16 %v1086, %v1082
    %v1351 = vpack.c.b16 %v1087, %v1083
    %v1352 = vpack.c.b16 %v1088, %v1084
    %v1353 = vpack.c.b16 %v1093, %v1089
    %v1354 = vpack.c.b16 %v1094, %v1090
    %v1355 = vpack.c.b16 %v1095, %v1091
    %v1356 = vpack.c.b16 %v1096, %v1092
    %v1357 = vpack.c.b16 %v1101, %v1097
    %v1358 = vpack.c.b16 %v1102, %v1098
    %v1359 = vpack.c.b16 %v1103, %v1099
    %v1360 = vpack.c.b16 %v1104, %v1100
    %1617 = vmatprep.subr.bf16.mxu0 %v1106
    %1618 = vmatpush1.bf16.msra.mxu0 %v1105
    %1619 = vmatprep.subr.bf16.mxu0 %v1110
    %1620 = vmatpush1.bf16.msra.mxu0 %v1109
    %1621 = vmatprep.subr.bf16.mxu0 %v1114
    %1622 = vmatpush1.bf16.msra.mxu0 %v1113
    %1623 = vmatprep.subr.bf16.mxu0 %v1118
    %1624 = vmatpush1.bf16.msra.mxu0 %v1117
    %1625 = vmatprep.subr.bf16.mxu0 %v1122
    %1626 = vmatpush1.bf16.msra.mxu0 %v1121
    %1627 = vmatprep.subr.bf16.mxu0 %v1126
    %1628 = vmatpush1.bf16.msra.mxu0 %v1125
    %1629 = vmatprep.subr.bf16.mxu0 %v1130
    %1630 = vmatpush1.bf16.msra.mxu0 %v1129
    %1631 = vmatprep.subr.bf16.mxu0 %v1134
    %1632 = vmatpush1.bf16.msra.mxu0 %v1133
    %1633 = vmatprep.subr.bf16.mxu0 %v1138
    %1634 = vmatpush1.bf16.msra.mxu0 %v1137
    %1635 = vmatprep.subr.bf16.mxu0 %v1142
    %1636 = vmatpush1.bf16.msra.mxu0 %v1141
    %1637 = vmatprep.subr.bf16.mxu0 %v1146
    %1638 = vmatpush1.bf16.msra.mxu0 %v1145
    %1639 = vmatprep.subr.bf16.mxu0 %v1150
    %1640 = vmatpush1.bf16.msra.mxu0 %v1149
    %1641 = vmatprep.subr.bf16.mxu0 %v1154
    %1642 = vmatpush1.bf16.msra.mxu0 %v1153
    %1643 = vmatprep.subr.bf16.mxu0 %v1158
    %1644 = vmatpush1.bf16.msra.mxu0 %v1157
    %1645 = vmatprep.subr.bf16.mxu0 %v1162
    %1646 = vmatpush1.bf16.msra.mxu0 %v1161
    %1647 = vmatprep.subr.bf16.mxu0 %v1166
    %1648 = vmatpush1.bf16.msra.mxu0 %v1165
    %1649 = vmatprep.mubr.bf16.mxu0 %v52
    %1650 = vmatmul.mubr.bf16.gmra.mrb[0].mxu0 %v51
    %v1651 = vpop.f32.mrb[0].mxu0
    %v1652 = vadd.f32 %v320, %v1651
    %v1653 = vpop.f32.mrb[0].mxu0
    %v1654 = vadd.f32 %v324, %v1653
    %v1655 = vpop.f32.mrb[0].mxu0
    %v1656 = vadd.f32 %v320, %v1655
    %v1657 = vpop.f32.mrb[0].mxu0
    %v1658 = vadd.f32 %v324, %v1657
    %1659 = vdwg.mxu0
    %1660 = vmatprep.subr.bf16.mxu0 %v1170
    %1661 = vmatpush1.bf16.msra.mxu0 %v1169
    %1662 = vmatprep.subr.bf16.mxu0 %v1174
    %1663 = vmatpush1.bf16.msra.mxu0 %v1173
    %1664 = vmatprep.subr.bf16.mxu0 %v1178
    %1665 = vmatpush1.bf16.msra.mxu0 %v1177
    %1666 = vmatprep.subr.bf16.mxu0 %v1182
    %1667 = vmatpush1.bf16.msra.mxu0 %v1181
    %1668 = vmatprep.subr.bf16.mxu0 %v1186
    %1669 = vmatpush1.bf16.msra.mxu0 %v1185
    %1670 = vmatprep.subr.bf16.mxu0 %v1190
    %1671 = vmatpush1.bf16.msra.mxu0 %v1189
    %1672 = vmatprep.subr.bf16.mxu0 %v1194
    %1673 = vmatpush1.bf16.msra.mxu0 %v1193
    %1674 = vmatprep.subr.bf16.mxu0 %v1198
    %1675 = vmatpush1.bf16.msra.mxu0 %v1197
    %1676 = vmatprep.subr.bf16.mxu0 %v1202
    %1677 = vmatpush1.bf16.msra.mxu0 %v1201
    %1678 = vmatprep.subr.bf16.mxu0 %v1206
    %1679 = vmatpush1.bf16.msra.mxu0 %v1205
    %1680 = vmatprep.subr.bf16.mxu0 %v1210
    %1681 = vmatpush1.bf16.msra.mxu0 %v1209
    %1682 = vmatprep.subr.bf16.mxu0 %v1214
    %1683 = vmatpush1.bf16.msra.mxu0 %v1213
    %1684 = vmatprep.subr.bf16.mxu0 %v1218
    %1685 = vmatpush1.bf16.msra.mxu0 %v1217
    %1686 = vmatprep.subr.bf16.mxu0 %v1222
    %1687 = vmatpush1.bf16.msra.mxu0 %v1221
    %1688 = vmatprep.subr.bf16.mxu0 %v1226
    %1689 = vmatpush1.bf16.msra.mxu0 %v1225
    %1690 = vmatprep.subr.bf16.mxu0 %v1230
    %1691 = vmatpush1.bf16.msra.mxu0 %v1229
    %1692 = vmatprep.mubr.bf16.mxu0 %v54
    %1693 = vmatmul.mubr.bf16.gmra.mrb[0].mxu0 %v53
    %v1694 = vpop.f32.mrb[0].mxu0
    %v1695 = vadd.f32 %v1652, %v1694
    %v1696 = vpop.f32.mrb[0].mxu0
    %v1697 = vadd.f32 %v1654, %v1696
    %v1698 = vpop.f32.mrb[0].mxu0
    %v1699 = vadd.f32 %v1656, %v1698
    %v1700 = vpop.f32.mrb[0].mxu0
    %v1701 = vadd.f32 %v1658, %v1700
    %1702 = vdwg.mxu0
    %1703 = vmatprep.subr.bf16.mxu0 %v1234
    %1704 = vmatpush1.bf16.msra.mxu0 %v1233
    %1705 = vmatprep.subr.bf16.mxu0 %v1238
    %1706 = vmatpush1.bf16.msra.mxu0 %v1237
    %1707 = vmatprep.subr.bf16.mxu0 %v1242
    %1708 = vmatpush1.bf16.msra.mxu0 %v1241
    %1709 = vmatprep.subr.bf16.mxu0 %v1246
    %1710 = vmatpush1.bf16.msra.mxu0 %v1245
    %1711 = vmatprep.subr.bf16.mxu0 %v1250
    %1712 = vmatpush1.bf16.msra.mxu0 %v1249
    %1713 = vmatprep.subr.bf16.mxu0 %v1254
    %1714 = vmatpush1.bf16.msra.mxu0 %v1253
    %1715 = vmatprep.subr.bf16.mxu0 %v1258
    %1716 = vmatpush1.bf16.msra.mxu0 %v1257
    %1717 = vmatprep.subr.bf16.mxu0 %v1262
    %1718 = vmatpush1.bf16.msra.mxu0 %v1261
    %1719 = vmatprep.subr.bf16.mxu0 %v1266
    %1720 = vmatpush1.bf16.msra.mxu0 %v1265
    %1721 = vmatprep.subr.bf16.mxu0 %v1270
    %1722 = vmatpush1.bf16.msra.mxu0 %v1269
    %1723 = vmatprep.subr.bf16.mxu0 %v1274
    %1724 = vmatpush1.bf16.msra.mxu0 %v1273
    %1725 = vmatprep.subr.bf16.mxu0 %v1278
    %1726 = vmatpush1.bf16.msra.mxu0 %v1277
    %1727 = vmatprep.subr.bf16.mxu0 %v1282
    %1728 = vmatpush1.bf16.msra.mxu0 %v1281
    %1729 = vmatprep.subr.bf16.mxu0 %v1286
    %1730 = vmatpush1.bf16.msra.mxu0 %v1285
    %1731 = vmatprep.subr.bf16.mxu0 %v1290
    %1732 = vmatpush1.bf16.msra.mxu0 %v1289
    %1733 = vmatprep.subr.bf16.mxu0 %v1294
    %1734 = vmatpush1.bf16.msra.mxu0 %v1293
    %1735 = vmatprep.mubr.bf16.mxu0 %v56
    %1736 = vmatmul.mubr.bf16.gmra.mrb[0].mxu0 %v55
    %v1737 = vpop.f32.mrb[0].mxu0
    %v1738 = vadd.f32 %v1695, %v1737
    %v1739 = vpop.f32.mrb[0].mxu0
    %v1740 = vadd.f32 %v1697, %v1739
    %v1741 = vpop.f32.mrb[0].mxu0
    %v1742 = vadd.f32 %v1699, %v1741
    %v1743 = vpop.f32.mrb[0].mxu0
    %v1744 = vadd.f32 %v1701, %v1743
    %1745 = vdwg.mxu0
    %1746 = vmatprep.subr.bf16.mxu0 %v1298
    %1747 = vmatpush1.bf16.msra.mxu0 %v1297
    %1748 = vmatprep.subr.bf16.mxu0 %v1302
    %1749 = vmatpush1.bf16.msra.mxu0 %v1301
    %1750 = vmatprep.subr.bf16.mxu0 %v1306
    %1751 = vmatpush1.bf16.msra.mxu0 %v1305
    %1752 = vmatprep.subr.bf16.mxu0 %v1310
    %1753 = vmatpush1.bf16.msra.mxu0 %v1309
    %1754 = vmatprep.subr.bf16.mxu0 %v1314
    %1755 = vmatpush1.bf16.msra.mxu0 %v1313
    %1756 = vmatprep.subr.bf16.mxu0 %v1318
    %1757 = vmatpush1.bf16.msra.mxu0 %v1317
    %1758 = vmatprep.subr.bf16.mxu0 %v1322
    %1759 = vmatpush1.bf16.msra.mxu0 %v1321
    %1760 = vmatprep.subr.bf16.mxu0 %v1326
    %1761 = vmatpush1.bf16.msra.mxu0 %v1325
    %1762 = vmatprep.subr.bf16.mxu0 %v1330
    %1763 = vmatpush1.bf16.msra.mxu0 %v1329
    %1764 = vmatprep.subr.bf16.mxu0 %v1334
    %1765 = vmatpush1.bf16.msra.mxu0 %v1333
    %1766 = vmatprep.subr.bf16.mxu0 %v1338
    %1767 = vmatpush1.bf16.msra.mxu0 %v1337
    %1768 = vmatprep.subr.bf16.mxu0 %v1342
    %1769 = vmatpush1.bf16.msra.mxu0 %v1341
    %1770 = vmatprep.subr.bf16.mxu0 %v1346
    %1771 = vmatpush1.bf16.msra.mxu0 %v1345
    %1772 = vmatprep.subr.bf16.mxu0 %v1350
    %1773 = vmatpush1.bf16.msra.mxu0 %v1349
    %1774 = vmatprep.subr.bf16.mxu0 %v1354
    %1775 = vmatpush1.bf16.msra.mxu0 %v1353
    %1776 = vmatprep.subr.bf16.mxu0 %v1358
    %1777 = vmatpush1.bf16.msra.mxu0 %v1357
    %1778 = vmatprep.mubr.bf16.mxu0 %v58
    %1779 = vmatmul.mubr.bf16.gmra.mrb[0].mxu0 %v57
    %v1780 = vpop.f32.mrb[0].mxu0
    %v1781 = vadd.f32 %v1738, %v1780
    %v1782 = vpop.f32.mrb[0].mxu0
    %v1783 = vadd.f32 %v1740, %v1782
    %v1784 = vpop.f32.mrb[0].mxu0
    %v1785 = vadd.f32 %v1742, %v1784
    %v1786 = vpop.f32.mrb[0].mxu0
    %v1787 = vadd.f32 %v1744, %v1786
    %1788 = vdwg.mxu0
    %1789 = vmatprep.subr.bf16.mxu0 %v1108
    %1790 = vmatpush1.bf16.msra.mxu0 %v1107
    %1791 = vmatprep.subr.bf16.mxu0 %v1112
    %1792 = vmatpush1.bf16.msra.mxu0 %v1111
    %1793 = vmatprep.subr.bf16.mxu0 %v1116
    %1794 = vmatpush1.bf16.msra.mxu0 %v1115
    %1795 = vmatprep.subr.bf16.mxu0 %v1120
    %1796 = vmatpush1.bf16.msra.mxu0 %v1119
    %1797 = vmatprep.subr.bf16.mxu0 %v1124
    %1798 = vmatpush1.bf16.msra.mxu0 %v1123
    %1799 = vmatprep.subr.bf16.mxu0 %v1128
    %1800 = vmatpush1.bf16.msra.mxu0 %v1127
    %1801 = vmatprep.subr.bf16.mxu0 %v1132
    %1802 = vmatpush1.bf16.msra.mxu0 %v1131
    %1803 = vmatprep.subr.bf16.mxu0 %v1136
    %1804 = vmatpush1.bf16.msra.mxu0 %v1135
    %1805 = vmatprep.subr.bf16.mxu0 %v1140
    %1806 = vmatpush1.bf16.msra.mxu0 %v1139
    %1807 = vmatprep.subr.bf16.mxu0 %v1144
    %1808 = vmatpush1.bf16.msra.mxu0 %v1143
    %1809 = vmatprep.subr.bf16.mxu0 %v1148
    %1810 = vmatpush1.bf16.msra.mxu0 %v1147
    %1811 = vmatprep.subr.bf16.mxu0 %v1152
    %1812 = vmatpush1.bf16.msra.mxu0 %v1151
    %1813 = vmatprep.subr.bf16.mxu0 %v1156
    %1814 = vmatpush1.bf16.msra.mxu0 %v1155
    %1815 = vmatprep.subr.bf16.mxu0 %v1160
    %1816 = vmatpush1.bf16.msra.mxu0 %v1159
    %1817 = vmatprep.subr.bf16.mxu0 %v1164
    %1818 = vmatpush1.bf16.msra.mxu0 %v1163
    %1819 = vmatprep.subr.bf16.mxu0 %v1168
    %1820 = vmatpush1.bf16.msra.mxu0 %v1167
    %1821 = vmatprep.mubr.bf16.mxu0 %v52
    %1822 = vmatmul.mubr.bf16.gmra.mrb[0].mxu0 %v51
    %v1823 = vpop.f32.mrb[0].mxu0
    %v1824 = vadd.f32 %v328, %v1823
    %v1825 = vpop.f32.mrb[0].mxu0
    %v1826 = vadd.f32 %v332, %v1825
    %v1827 = vpop.f32.mrb[0].mxu0
    %v1828 = vadd.f32 %v328, %v1827
    %v1829 = vpop.f32.mrb[0].mxu0
    %v1830 = vadd.f32 %v332, %v1829
    %1831 = vdwg.mxu0
    %1832 = vmatprep.subr.bf16.mxu0 %v1172
    %1833 = vmatpush1.bf16.msra.mxu0 %v1171
    %1834 = vmatprep.subr.bf16.mxu0 %v1176
    %1835 = vmatpush1.bf16.msra.mxu0 %v1175
    %1836 = vmatprep.subr.bf16.mxu0 %v1180
    %1837 = vmatpush1.bf16.msra.mxu0 %v1179
    %1838 = vmatprep.subr.bf16.mxu0 %v1184
    %1839 = vmatpush1.bf16.msra.mxu0 %v1183
    %1840 = vmatprep.subr.bf16.mxu0 %v1188
    %1841 = vmatpush1.bf16.msra.mxu0 %v1187
    %1842 = vmatprep.subr.bf16.mxu0 %v1192
    %1843 = vmatpush1.bf16.msra.mxu0 %v1191
    %1844 = vmatprep.subr.bf16.mxu0 %v1196
    %1845 = vmatpush1.bf16.msra.mxu0 %v1195
    %1846 = vmatprep.subr.bf16.mxu0 %v1200
    %1847 = vmatpush1.bf16.msra.mxu0 %v1199
    %1848 = vmatprep.subr.bf16.mxu0 %v1204
    %1849 = vmatpush1.bf16.msra.mxu0 %v1203
    %1850 = vmatprep.subr.bf16.mxu0 %v1208
    %1851 = vmatpush1.bf16.msra.mxu0 %v1207
    %1852 = vmatprep.subr.bf16.mxu0 %v1212
    %1853 = vmatpush1.bf16.msra.mxu0 %v1211
    %1854 = vmatprep.subr.bf16.mxu0 %v1216
    %1855 = vmatpush1.bf16.msra.mxu0 %v1215
    %1856 = vmatprep.subr.bf16.mxu0 %v1220
    %1857 = vmatpush1.bf16.msra.mxu0 %v1219
    %1858 = vmatprep.subr.bf16.mxu0 %v1224
    %1859 = vmatpush1.bf16.msra.mxu0 %v1223
    %1860 = vmatprep.subr.bf16.mxu0 %v1228
    %1861 = vmatpush1.bf16.msra.mxu0 %v1227
    %1862 = vmatprep.subr.bf16.mxu0 %v1232
    %1863 = vmatpush1.bf16.msra.mxu0 %v1231
    %1864 = vmatprep.mubr.bf16.mxu0 %v54
    %1865 = vmatmul.mubr.bf16.gmra.mrb[0].mxu0 %v53
    %v1866 = vpop.f32.mrb[0].mxu0
    %v1867 = vadd.f32 %v1824, %v1866
    %v1868 = vpop.f32.mrb[0].mxu0
    %v1869 = vadd.f32 %v1826, %v1868
    %v1870 = vpop.f32.mrb[0].mxu0
    %v1871 = vadd.f32 %v1828, %v1870
    %v1872 = vpop.f32.mrb[0].mxu0
    %v1873 = vadd.f32 %v1830, %v1872
    %1874 = vdwg.mxu0
    %1875 = vmatprep.subr.bf16.mxu0 %v1236
    %1876 = vmatpush1.bf16.msra.mxu0 %v1235
    %1877 = vmatprep.subr.bf16.mxu0 %v1240
    %1878 = vmatpush1.bf16.msra.mxu0 %v1239
    %1879 = vmatprep.subr.bf16.mxu0 %v1244
    %1880 = vmatpush1.bf16.msra.mxu0 %v1243
    %1881 = vmatprep.subr.bf16.mxu0 %v1248
    %1882 = vmatpush1.bf16.msra.mxu0 %v1247
    %1883 = vmatprep.subr.bf16.mxu0 %v1252
    %1884 = vmatpush1.bf16.msra.mxu0 %v1251
    %1885 = vmatprep.subr.bf16.mxu0 %v1256
    %1886 = vmatpush1.bf16.msra.mxu0 %v1255
    %1887 = vmatprep.subr.bf16.mxu0 %v1260
    %1888 = vmatpush1.bf16.msra.mxu0 %v1259
    %1889 = vmatprep.subr.bf16.mxu0 %v1264
    %1890 = vmatpush1.bf16.msra.mxu0 %v1263
    %1891 = vmatprep.subr.bf16.mxu0 %v1268
    %1892 = vmatpush1.bf16.msra.mxu0 %v1267
    %1893 = vmatprep.subr.bf16.mxu0 %v1272
    %1894 = vmatpush1.bf16.msra.mxu0 %v1271
    %1895 = vmatprep.subr.bf16.mxu0 %v1276
    %1896 = vmatpush1.bf16.msra.mxu0 %v1275
    %1897 = vmatprep.subr.bf16.mxu0 %v1280
    %1898 = vmatpush1.bf16.msra.mxu0 %v1279
    %1899 = vmatprep.subr.bf16.mxu0 %v1284
    %1900 = vmatpush1.bf16.msra.mxu0 %v1283
    %1901 = vmatprep.subr.bf16.mxu0 %v1288
    %1902 = vmatpush1.bf16.msra.mxu0 %v1287
    %1903 = vmatprep.subr.bf16.mxu0 %v1292
    %1904 = vmatpush1.bf16.msra.mxu0 %v1291
    %1905 = vmatprep.subr.bf16.mxu0 %v1296
    %1906 = vmatpush1.bf16.msra.mxu0 %v1295
    %1907 = vmatprep.mubr.bf16.mxu0 %v56
    %1908 = vmatmul.mubr.bf16.gmra.mrb[0].mxu0 %v55
    %v1909 = vpop.f32.mrb[0].mxu0
    %v1910 = vadd.f32 %v1867, %v1909
    %v1911 = vpop.f32.mrb[0].mxu0
    %v1912 = vadd.f32 %v1869, %v1911
    %v1913 = vpop.f32.mrb[0].mxu0
    %v1914 = vadd.f32 %v1871, %v1913
    %v1915 = vpop.f32.mrb[0].mxu0
    %v1916 = vadd.f32 %v1873, %v1915
    %1917 = vdwg.mxu0
    %1918 = vmatprep.subr.bf16.mxu0 %v1300
    %1919 = vmatpush1.bf16.msra.mxu0 %v1299
    %1920 = vmatprep.subr.bf16.mxu0 %v1304
    %1921 = vmatpush1.bf16.msra.mxu0 %v1303
    %1922 = vmatprep.subr.bf16.mxu0 %v1308
    %1923 = vmatpush1.bf16.msra.mxu0 %v1307
    %1924 = vmatprep.subr.bf16.mxu0 %v1312
    %1925 = vmatpush1.bf16.msra.mxu0 %v1311
    %1926 = vmatprep.subr.bf16.mxu0 %v1316
    %1927 = vmatpush1.bf16.msra.mxu0 %v1315
    %1928 = vmatprep.subr.bf16.mxu0 %v1320
    %1929 = vmatpush1.bf16.msra.mxu0 %v1319
    %1930 = vmatprep.subr.bf16.mxu0 %v1324
    %1931 = vmatpush1.bf16.msra.mxu0 %v1323
    %1932 = vmatprep.subr.bf16.mxu0 %v1328
    %1933 = vmatpush1.bf16.msra.mxu0 %v1327
    %1934 = vmatprep.subr.bf16.mxu0 %v1332
    %1935 = vmatpush1.bf16.msra.mxu0 %v1331
    %1936 = vmatprep.subr.bf16.mxu0 %v1336
    %1937 = vmatpush1.bf16.msra.mxu0 %v1335
    %1938 = vmatprep.subr.bf16.mxu0 %v1340
    %1939 = vmatpush1.bf16.msra.mxu0 %v1339
    %1940 = vmatprep.subr.bf16.mxu0 %v1344
    %1941 = vmatpush1.bf16.msra.mxu0 %v1343
    %1942 = vmatprep.subr.bf16.mxu0 %v1348
    %1943 = vmatpush1.bf16.msra.mxu0 %v1347
    %1944 = vmatprep.subr.bf16.mxu0 %v1352
    %1945 = vmatpush1.bf16.msra.mxu0 %v1351
    %1946 = vmatprep.subr.bf16.mxu0 %v1356
    %1947 = vmatpush1.bf16.msra.mxu0 %v1355
    %1948 = vmatprep.subr.bf16.mxu0 %v1360
    %1949 = vmatpush1.bf16.msra.mxu0 %v1359
    %1950 = vmatprep.mubr.bf16.mxu0 %v58
    %1951 = vmatmul.mubr.bf16.gmra.mrb[0].mxu0 %v57
    %v1952 = vpop.f32.mrb[0].mxu0
    %v1953 = vadd.f32 %v1910, %v1952
    %v1954 = vpop.f32.mrb[0].mxu0
    %v1955 = vadd.f32 %v1912, %v1954
    %v1956 = vpop.f32.mrb[0].mxu0
    %v1957 = vadd.f32 %v1914, %v1956
    %v1958 = vpop.f32.mrb[0].mxu0
    %v1959 = vadd.f32 %v1916, %v1958
    %1960 = vdwg.mxu0
    %v1961 = vmax.f32 %v1781, 0.0
    %v1962 = vmax.f32 %v1783, 0.0
    %v1963 = vmax.f32 %v1953, 0.0
    %v1964 = vmax.f32 %v1955, 0.0
    %v1965 = vmax.f32 %v1785, 0.0
    %v1966 = vmax.f32 %v1787, 0.0
    %v1967 = vmax.f32 %v1957, 0.0
    %v1968 = vmax.f32 %v1959, 0.0
    %v1969 = vpack.c.bf16 %v1965, %v1961
    %v1970 = vpack.c.bf16 %v1966, %v1962
    %v1971 = vpack.c.bf16 %v1967, %v1963
    %v1972 = vpack.c.bf16 %v1968, %v1964
    %v1973 = vld [vmem:[%s3] sm:$0xf]
    %v1974 = vld [vmem:[%s3 + $0x4] sm:$0xf]
    %v1975 = vld [vmem:[%s3 + $0x8] sm:$0xf]
    %v1976 = vld [vmem:[%s3 + $0xc] sm:$0xf]
    %v1977 = vld [vmem:[%s3 + $0x10] sm:$0xf]
    %v1978 = vld [vmem:[%s3 + $0x14] sm:$0xf]
    %v1979 = vld [vmem:[%s3 + $0x18] sm:$0xf]
    %v1980 = vld [vmem:[%s3 + $0x1c] sm:$0xf]
    %v1981 = vld [vmem:[%s3 + $0x20] sm:$0xf]
    %v1982 = vld [vmem:[%s3 + $0x24] sm:$0xf]
    %v1983 = vld [vmem:[%s3 + $0x28] sm:$0xf]
    %v1984 = vld [vmem:[%s3 + $0x2c] sm:$0xf]
    %v1985 = vld [vmem:[%s3 + $0x30] sm:$0xf]
    %v1986 = vld [vmem:[%s3 + $0x34] sm:$0xf]
    %v1987 = vld [vmem:[%s3 + $0x38] sm:$0xf]
    %v1988 = vld [vmem:[%s3 + $0x3c] sm:$0xf]
    %v1989 = vld [vmem:[%s3 + $0x40] sm:$0xf]
    %v1990 = vld [vmem:[%s3 + $0x44] sm:$0xf]
    %v1991 = vld [vmem:[%s3 + $0x48] sm:$0xf]
    %v1992 = vld [vmem:[%s3 + $0x4c] sm:$0xf]
    %v1993 = vld [vmem:[%s3 + $0x50] sm:$0xf]
    %v1994 = vld [vmem:[%s3 + $0x54] sm:$0xf]
    %v1995 = vld [vmem:[%s3 + $0x58] sm:$0xf]
    %v1996 = vld [vmem:[%s3 + $0x5c] sm:$0xf]
    %v1997 = vld [vmem:[%s3 + $0x60] sm:$0xf]
    %v1998 = vld [vmem:[%s3 + $0x64] sm:$0xf]
    %v1999 = vld [vmem:[%s3 + $0x68] sm:$0xf]
    %v2000 = vld [vmem:[%s3 + $0x6c] sm:$0xf]
    %v2001 = vld [vmem:[%s3 + $0x70] sm:$0xf]
    %v2002 = vld [vmem:[%s3 + $0x74] sm:$0xf]
    %v2003 = vld [vmem:[%s3 + $0x78] sm:$0xf]
    %v2004 = vld [vmem:[%s3 + $0x7c] sm:$0xf]
    %v2005 = vld [vmem:[%s3 + $0x80] sm:$0xf]
    %v2006 = vld [vmem:[%s3 + $0x84] sm:$0xf]
    %v2007 = vld [vmem:[%s3 + $0x88] sm:$0xf]
    %v2008 = vld [vmem:[%s3 + $0x8c] sm:$0xf]
    %v2009 = vld [vmem:[%s3 + $0x90] sm:$0xf]
    %v2010 = vld [vmem:[%s3 + $0x94] sm:$0xf]
    %v2011 = vld [vmem:[%s3 + $0x98] sm:$0xf]
    %v2012 = vld [vmem:[%s3 + $0x9c] sm:$0xf]
    %v2013 = vld [vmem:[%s3 + $0xa0] sm:$0xf]
    %v2014 = vld [vmem:[%s3 + $0xa4] sm:$0xf]
    %v2015 = vld [vmem:[%s3 + $0xa8] sm:$0xf]
    %v2016 = vld [vmem:[%s3 + $0xac] sm:$0xf]
    %v2017 = vld [vmem:[%s3 + $0xb0] sm:$0xf]
    %v2018 = vld [vmem:[%s3 + $0xb4] sm:$0xf]
    %v2019 = vld [vmem:[%s3 + $0xb8] sm:$0xf]
    %v2020 = vld [vmem:[%s3 + $0xbc] sm:$0xf]
    %v2021 = vld [vmem:[%s3 + $0xc0] sm:$0xf]
    %v2022 = vld [vmem:[%s3 + $0xc4] sm:$0xf]
    %v2023 = vld [vmem:[%s3 + $0xc8] sm:$0xf]
    %v2024 = vld [vmem:[%s3 + $0xcc] sm:$0xf]
    %v2025 = vld [vmem:[%s3 + $0xd0] sm:$0xf]
    %v2026 = vld [vmem:[%s3 + $0xd4] sm:$0xf]
    %v2027 = vld [vmem:[%s3 + $0xd8] sm:$0xf]
    %v2028 = vld [vmem:[%s3 + $0xdc] sm:$0xf]
    %v2029 = vld [vmem:[%s3 + $0xe0] sm:$0xf]
    %v2030 = vld [vmem:[%s3 + $0xe4] sm:$0xf]
    %v2031 = vld [vmem:[%s3 + $0xe8] sm:$0xf]
    %v2032 = vld [vmem:[%s3 + $0xec] sm:$0xf]
    %v2033 = vld [vmem:[%s3 + $0xf0] sm:$0xf]
    %v2034 = vld [vmem:[%s3 + $0xf4] sm:$0xf]
    %v2035 = vld [vmem:[%s3 + $0xf8] sm:$0xf]
    %v2036 = vld [vmem:[%s3 + $0xfc] sm:$0xf]
    %v2037 = vld [vmem:[%s4] sm:$0x1]
    %v2039 = vlaneseq
    %v2040 = vshrl.u32 %v2039, 7
    %v2041 = vsub.s32 0, %v2040
    %v2042 = vrot.slane %v2037, %v2041
    %v2108 = vunpack.c.l.b16 %v1973
    %v2109 = vunpack.c.l.b16 %v1974
    %v2110 = vunpack.c.l.b16 %v1975
    %v2111 = vunpack.c.l.b16 %v1976
    %v2112 = vunpack.c.l.b16 %v1977
    %v2113 = vunpack.c.l.b16 %v1978
    %v2114 = vunpack.c.l.b16 %v1979
    %v2115 = vunpack.c.l.b16 %v1980
    %v2116 = vunpack.c.l.b16 %v1981
    %v2117 = vunpack.c.l.b16 %v1982
    %v2118 = vunpack.c.l.b16 %v1983
    %v2119 = vunpack.c.l.b16 %v1984
    %v2120 = vunpack.c.l.b16 %v1985
    %v2121 = vunpack.c.l.b16 %v1986
    %v2122 = vunpack.c.l.b16 %v1987
    %v2123 = vunpack.c.l.b16 %v1988
    %v2124 = vunpack.c.l.b16 %v1989
    %v2125 = vunpack.c.l.b16 %v1990
    %v2126 = vunpack.c.l.b16 %v1991
    %v2127 = vunpack.c.l.b16 %v1992
    %v2128 = vunpack.c.l.b16 %v1993
    %v2129 = vunpack.c.l.b16 %v1994
    %v2130 = vunpack.c.l.b16 %v1995
    %v2131 = vunpack.c.l.b16 %v1996
    %v2132 = vunpack.c.l.b16 %v1997
    %v2133 = vunpack.c.l.b16 %v1998
    %v2134 = vunpack.c.l.b16 %v1999
    %v2135 = vunpack.c.l.b16 %v2000
    %v2136 = vunpack.c.l.b16 %v2001
    %v2137 = vunpack.c.l.b16 %v2002
    %v2138 = vunpack.c.l.b16 %v2003
    %v2139 = vunpack.c.l.b16 %v2004
    %v2140 = vunpack.c.l.b16 %v2005
    %v2141 = vunpack.c.l.b16 %v2006
    %v2142 = vunpack.c.l.b16 %v2007
    %v2143 = vunpack.c.l.b16 %v2008
    %v2144 = vunpack.c.l.b16 %v2009
    %v2145 = vunpack.c.l.b16 %v2010
    %v2146 = vunpack.c.l.b16 %v2011
    %v2147 = vunpack.c.l.b16 %v2012
    %v2148 = vunpack.c.l.b16 %v2013
    %v2149 = vunpack.c.l.b16 %v2014
    %v2150 = vunpack.c.l.b16 %v2015
    %v2151 = vunpack.c.l.b16 %v2016
    %v2152 = vunpack.c.l.b16 %v2017
    %v2153 = vunpack.c.l.b16 %v2018
    %v2154 = vunpack.c.l.b16 %v2019
    %v2155 = vunpack.c.l.b16 %v2020
    %v2156 = vunpack.c.l.b16 %v2021
    %v2157 = vunpack.c.l.b16 %v2022
    %v2158 = vunpack.c.l.b16 %v2023
    %v2159 = vunpack.c.l.b16 %v2024
    %v2160 = vunpack.c.l.b16 %v2025
    %v2161 = vunpack.c.l.b16 %v2026
    %v2162 = vunpack.c.l.b16 %v2027
    %v2163 = vunpack.c.l.b16 %v2028
    %v2164 = vunpack.c.l.b16 %v2029
    %v2165 = vunpack.c.l.b16 %v2030
    %v2166 = vunpack.c.l.b16 %v2031
    %v2167 = vunpack.c.l.b16 %v2032
    %v2168 = vunpack.c.l.b16 %v2033
    %v2169 = vunpack.c.l.b16 %v2034
    %v2170 = vunpack.c.l.b16 %v2035
    %v2171 = vunpack.c.l.b16 %v2036
    %v2172 = vpack.c.b16 %v2109, %v2108
    %v2173 = vpack.c.b16 %v2111, %v2110
    %v2174 = vpack.c.b16 %v2113, %v2112
    %v2175 = vpack.c.b16 %v2115, %v2114
    %v2176 = vpack.c.b16 %v2117, %v2116
    %v2177 = vpack.c.b16 %v2119, %v2118
    %v2178 = vpack.c.b16 %v2121, %v2120
    %v2179 = vpack.c.b16 %v2123, %v2122
    %v2180 = vpack.c.b16 %v2125, %v2124
    %v2181 = vpack.c.b16 %v2127, %v2126
    %v2182 = vpack.c.b16 %v2129, %v2128
    %v2183 = vpack.c.b16 %v2131, %v2130
    %v2184 = vpack.c.b16 %v2133, %v2132
    %v2185 = vpack.c.b16 %v2135, %v2134
    %v2186 = vpack.c.b16 %v2137, %v2136
    %v2187 = vpack.c.b16 %v2139, %v2138
    %v2188 = vpack.c.b16 %v2141, %v2140
    %v2189 = vpack.c.b16 %v2143, %v2142
    %v2190 = vpack.c.b16 %v2145, %v2144
    %v2191 = vpack.c.b16 %v2147, %v2146
    %v2192 = vpack.c.b16 %v2149, %v2148
    %v2193 = vpack.c.b16 %v2151, %v2150
    %v2194 = vpack.c.b16 %v2153, %v2152
    %v2195 = vpack.c.b16 %v2155, %v2154
    %v2196 = vpack.c.b16 %v2157, %v2156
    %v2197 = vpack.c.b16 %v2159, %v2158
    %v2198 = vpack.c.b16 %v2161, %v2160
    %v2199 = vpack.c.b16 %v2163, %v2162
    %v2200 = vpack.c.b16 %v2165, %v2164
    %v2201 = vpack.c.b16 %v2167, %v2166
    %v2202 = vpack.c.b16 %v2169, %v2168
    %v2203 = vpack.c.b16 %v2171, %v2170
    %2236 = vmatprep.subr.bf16.mxu0 0
    %2237 = vmatpush1.bf16.msra.mxu0 %v2172
    %2238 = vmatprep.subr.bf16.mxu0 0
    %2239 = vmatpush1.bf16.msra.mxu0 %v2173
    %2240 = vmatprep.subr.bf16.mxu0 0
    %2241 = vmatpush1.bf16.msra.mxu0 %v2174
    %2242 = vmatprep.subr.bf16.mxu0 0
    %2243 = vmatpush1.bf16.msra.mxu0 %v2175
    %2244 = vmatprep.subr.bf16.mxu0 0
    %2245 = vmatpush1.bf16.msra.mxu0 %v2176
    %2246 = vmatprep.subr.bf16.mxu0 0
    %2247 = vmatpush1.bf16.msra.mxu0 %v2177
    %2248 = vmatprep.subr.bf16.mxu0 0
    %2249 = vmatpush1.bf16.msra.mxu0 %v2178
    %2250 = vmatprep.subr.bf16.mxu0 0
    %2251 = vmatpush1.bf16.msra.mxu0 %v2179
    %2252 = vmatprep.subr.bf16.mxu0 0
    %2253 = vmatpush1.bf16.msra.mxu0 %v2180
    %2254 = vmatprep.subr.bf16.mxu0 0
    %2255 = vmatpush1.bf16.msra.mxu0 %v2181
    %2256 = vmatprep.subr.bf16.mxu0 0
    %2257 = vmatpush1.bf16.msra.mxu0 %v2182
    %2258 = vmatprep.subr.bf16.mxu0 0
    %2259 = vmatpush1.bf16.msra.mxu0 %v2183
    %2260 = vmatprep.subr.bf16.mxu0 0
    %2261 = vmatpush1.bf16.msra.mxu0 %v2184
    %2262 = vmatprep.subr.bf16.mxu0 0
    %2263 = vmatpush1.bf16.msra.mxu0 %v2185
    %2264 = vmatprep.subr.bf16.mxu0 0
    %2265 = vmatpush1.bf16.msra.mxu0 %v2186
    %2266 = vmatprep.subr.bf16.mxu0 0
    %2267 = vmatpush1.bf16.msra.mxu0 %v2187
    %2268 = vmatprep.mubr.bf16.mxu0 %v1970
    %2269 = vmatmul.mubr.bf16.gmra.mrb[0].mxu0 %v1969
    %v2270 = vpop.f32.mrb[0].mxu0
    %v2271 = vadd.f32 %v2042, %v2270
    %v2272 = vpop.f32.mrb[0].mxu0
    %v2273 = vpop.f32.mrb[0].mxu0
    %v2274 = vadd.f32 %v2042, %v2273
    %v2275 = vpop.f32.mrb[0].mxu0
    %2276 = vdwg.mxu0
    %2277 = vmatprep.subr.bf16.mxu0 0
    %2278 = vmatpush1.bf16.msra.mxu0 %v2188
    %2279 = vmatprep.subr.bf16.mxu0 0
    %2280 = vmatpush1.bf16.msra.mxu0 %v2189
    %2281 = vmatprep.subr.bf16.mxu0 0
    %2282 = vmatpush1.bf16.msra.mxu0 %v2190
    %2283 = vmatprep.subr.bf16.mxu0 0
    %2284 = vmatpush1.bf16.msra.mxu0 %v2191
    %2285 = vmatprep.subr.bf16.mxu0 0
    %2286 = vmatpush1.bf16.msra.mxu0 %v2192
    %2287 = vmatprep.subr.bf16.mxu0 0
    %2288 = vmatpush1.bf16.msra.mxu0 %v2193
    %2289 = vmatprep.subr.bf16.mxu0 0
    %2290 = vmatpush1.bf16.msra.mxu0 %v2194
    %2291 = vmatprep.subr.bf16.mxu0 0
    %2292 = vmatpush1.bf16.msra.mxu0 %v2195
    %2293 = vmatprep.subr.bf16.mxu0 0
    %2294 = vmatpush1.bf16.msra.mxu0 %v2196
    %2295 = vmatprep.subr.bf16.mxu0 0
    %2296 = vmatpush1.bf16.msra.mxu0 %v2197
    %2297 = vmatprep.subr.bf16.mxu0 0
    %2298 = vmatpush1.bf16.msra.mxu0 %v2198
    %2299 = vmatprep.subr.bf16.mxu0 0
    %2300 = vmatpush1.bf16.msra.mxu0 %v2199
    %2301 = vmatprep.subr.bf16.mxu0 0
    %2302 = vmatpush1.bf16.msra.mxu0 %v2200
    %2303 = vmatprep.subr.bf16.mxu0 0
    %2304 = vmatpush1.bf16.msra.mxu0 %v2201
    %2305 = vmatprep.subr.bf16.mxu0 0
    %2306 = vmatpush1.bf16.msra.mxu0 %v2202
    %2307 = vmatprep.subr.bf16.mxu0 0
    %2308 = vmatpush1.bf16.msra.mxu0 %v2203
    %2309 = vmatprep.mubr.bf16.mxu0 %v1972
    %2310 = vmatmul.mubr.bf16.gmra.mrb[0].mxu0 %v1971
    %v2311 = vpop.f32.mrb[0].mxu0
    %v2312 = vadd.f32 %v2271, %v2311
    %v2313 = vpop.f32.mrb[0].mxu0
    %v2314 = vpop.f32.mrb[0].mxu0
    %v2315 = vadd.f32 %v2274, %v2314
    %v2316 = vpop.f32.mrb[0].mxu0
    %2317 = vdwg.mxu0
    %2318 = vmax.xlane.f32.xlu0 %v2312
    %v2319 = vpop.xlane.xlu0 %2318
    %2320 = vmax.xlane.f32.xlu0 %v2315
    %v2321 = vpop.xlane.xlu0 %2320
    %v2322 = vsub.f32 %v2312, %v2319
    %v2323 = vsub.f32 %v2315, %v2321
    %v2324 = vmul.f32 %v2322, 1.442695
    %v2325 = vpow.pop %v2324
    %v2326 = vmul.f32 %v2323, 1.442695
    %v2327 = vpow.pop %v2326
    %2328 = vadd.xlane.f32.xlu0 %v2325
    %v2329 = vpop.xlane.xlu0 %2328
    %2330 = vadd.xlane.f32.xlu0 %v2327
    %v2331 = vpop.xlane.xlu0 %2330
    %v2332 = vlog2.pop %v2329
    %v2333 = vmul.f32 %v2332, 0.6931472
    %v2334 = vlog2.pop %v2331
    %v2335 = vmul.f32 %v2334, 0.6931472
    %v2336 = vsub.f32 %v2322, %v2333
    %v2337 = vsub.f32 %v2323, %v2335
    %2338 = vst [vmem:[%s5] sm:$0xff] %v2336
    %2339 = vst [vmem:[%s5 + $0x8] sm:$0xff] %v2337
    // Predicated region
    $region26: #{net_forward.1} parent=1 // pred_check
      _
    $region27: #{net_forward.1} parent=1 // pred_check_branch
      %2341 = sbr.rel (0) target = $region29
    $region28: #{net_forward.1} parent=1 // pred_region
      _
    $region29: #{net_forward.1} parent=1 // pred_fallthru
      _
    // Predicated region
    $region30: #{net_forward.1} parent=1 // pred_check
      _
    $region31: #{net_forward.1} parent=1 // pred_check_branch
      %2343 = sbr.rel (0) target = $region33
    $region32: #{net_forward.1} parent=1 // pred_region
      _
    $region33: #{net_forward.1} parent=1 // pred_fallthru
      _
    %2344 = vsyncpa [#allocation3], 1

</llo_original>
